<compile_context>
chip_gen: v7x
topology: tpu7x:2x2x1
jax: 0.10.0
libtpu: 0.0.40
codegen_flags: <defaults>
</compile_context>

<pallas_src>
import jax
import jax.numpy as jnp
from jax import lax
from jax.experimental import pallas as pl
from jax.experimental.pallas import tpu as pltpu

_INV_SQRT2 = 0.7071067811865476


def _gelu_linear_kernel(x_ref, w_ref, b_ref, o_ref):
    # x_ref: (tm, K)   w_ref: (tn, K)   b_ref: (1, tn)   o_ref: (tm, tn)
    x = x_ref[...].astype(jnp.float32)
    # Exact (erf-based) GELU, matching torch._C._nn.gelu default.
    g = 0.5 * x * (1.0 + lax.erf(x * _INV_SQRT2))
    acc = lax.dot_general(
        g,
        w_ref[...].astype(jnp.float32),
        dimension_numbers=(((1,), (1,)), ((), ())),   # contract K with K (no W^T copy)
        preferred_element_type=jnp.float32,
    )
    o_ref[...] = (acc + b_ref[...].astype(jnp.float32)).astype(o_ref.dtype)


def gelu_linear(x, weight, bias, *, tm=128, tn=256):
    """x: (B, S, K); weight: (N, K) torch-Linear layout; bias: (N,)."""
    B, S, K = x.shape
    N = weight.shape[0]
    M = B * S

    tn = min(tn, N)
    assert N % tn == 0 and tn % 128 == 0, "N tile must be lane-dense"
    assert tm % 8 == 0, "M tile must be sublane-aligned"

    x2d = x.reshape(M, K)
    # Pad rows so any sequence length works; gelu(0) @ W + b rows are sliced off.
    m_tiles = pl.cdiv(M, tm)
    M_pad = m_tiles * tm
    if M_pad != M:
        x2d = jnp.pad(x2d, ((0, M_pad - M), (0, 0)))

    b2d = bias.reshape(1, N)

    grid = (m_tiles, N // tn)

    out2d = pl.pallas_call(
        _gelu_linear_kernel,
        out_shape=jax.ShapeDtypeStruct((M_pad, N), x.dtype),
        grid_spec=pltpu.PrefetchScalarGridSpec(
            num_scalar_prefetch=0,
            grid=grid,
            in_specs=[
                pl.BlockSpec((tm, K), lambda i, j: (i, 0)),    # x tile (full K)
                pl.BlockSpec((tn, K), lambda i, j: (j, 0)),    # W tile, (N, K) layout
                pl.BlockSpec((1, tn), lambda i, j: (0, j)),    # bias tile
            ],
            out_specs=pl.BlockSpec((tm, tn), lambda i, j: (i, j)),
        ),
        compiler_params=pltpu.CompilerParams(
            dimension_semantics=("parallel", "parallel")
        ),
    )(x2d, weight, b2d)

    if M_pad != M:
        out2d = out2d[:M]
    return out2d.reshape(B, S, N)


def _reference(x, weight, bias):
    g = 0.5 * x * (1.0 + lax.erf(x * _INV_SQRT2))
    return jnp.einsum("bsk,nk->bsn", g, weight) + bias


if __name__ == "__main__":
    key = jax.random.PRNGKey(0)
    k_x, k_w, k_b = jax.random.split(key, 3)

    # Shapes implied by the module: x (1, 384, 1024), Linear(1024 -> 256).
    B, S, K, N = 1, 384, 1024, 256

    x = jax.random.normal(k_x, (B, S, K), dtype=jnp.float32)
    # Deterministic parameter init (synthetic, not a checkpoint load).
    bound = 1.0 / (K ** 0.5)
    weight = jax.random.uniform(k_w, (N, K), jnp.float32, -bound, bound)
    bias = jax.random.uniform(k_b, (N,), jnp.float32, -bound, bound)

    out = gelu_linear(x, weight, bias)
    out = jax.block_until_ready(out)

    ref = _reference(x, weight, bias)
    assert out.shape == (B, S, N)
    assert jnp.allclose(out, ref, atol=2e-5, rtol=2e-5), float(
        jnp.max(jnp.abs(out - ref))
    )
    print("KERNEL_OK")
</pallas_src>

<mosaic_0001>
module attributes {stable_mosaic.version = 11 : i64} {
  func.func @_gelu_linear_kernel(%arg0: i32, %arg1: i32, %arg2: memref<128x1024xf32, #tpu.memory_space<vmem>>, %arg3: memref<256x1024xf32, #tpu.memory_space<vmem>>, %arg4: memref<1x256xf32, #tpu.memory_space<vmem>>, %arg5: memref<128x256xf32, #tpu.memory_space<vmem>>) attributes {dimension_semantics = [#tpu.dimension_semantics<parallel>, #tpu.dimension_semantics<parallel>], iteration_bounds = array<i64: 3, 1>, scalar_prefetch = 0 : i64, scratch_operands = 0 : i64, tpu.core_type = #tpu.core_type<tc>, window_params = [{transform_indices = @transform_0, window_bounds = array<i64: 128, 1024>}, {transform_indices = @transform_1, window_bounds = array<i64: 256, 1024>}, {transform_indices = @transform_2, window_bounds = array<i64: 1, 256>}, {transform_indices = @transform_3, window_bounds = array<i64: 128, 256>}]} {
    %c0 = arith.constant 0 : index
    %c0_0 = arith.constant 0 : index
    %0 = vector.load %arg2[%c0, %c0_0] : memref<128x1024xf32, #tpu.memory_space<vmem>>, vector<128x1024xf32>
    %cst = arith.constant 5.000000e-01 : f32
    %1 = vector.broadcast %cst : f32 to vector<128x1024xf32>
    %2 = arith.mulf %1, %0 : vector<128x1024xf32>
    %cst_1 = arith.constant 0.707106769 : f32
    %3 = vector.broadcast %cst_1 : f32 to vector<128x1024xf32>
    %4 = arith.mulf %0, %3 : vector<128x1024xf32>
    %5 = math.erf %4 : vector<128x1024xf32>
    %cst_2 = arith.constant 1.000000e+00 : f32
    %6 = vector.broadcast %cst_2 : f32 to vector<128x1024xf32>
    %7 = arith.addf %6, %5 : vector<128x1024xf32>
    %8 = arith.mulf %2, %7 : vector<128x1024xf32>
    %c0_3 = arith.constant 0 : index
    %c0_4 = arith.constant 0 : index
    %9 = vector.load %arg3[%c0_3, %c0_4] : memref<256x1024xf32, #tpu.memory_space<vmem>>, vector<256x1024xf32>
    %cst_5 = arith.constant dense<0.000000e+00> : vector<128x256xf32>
    %10 = tpu.matmul %8, %9, %cst_5 {dimension_numbers = #tpu.dot_dimension_numbers<[1], [1], [0], [0], [0, 0, 1, 0], [], []>} : vector<128x1024xf32>, vector<256x1024xf32>, vector<128x256xf32> -> vector<128x256xf32>
    %c0_6 = arith.constant 0 : index
    %c0_7 = arith.constant 0 : index
    %11 = vector.load %arg4[%c0_6, %c0_7] : memref<1x256xf32, #tpu.memory_space<vmem>>, vector<1x256xf32>
    %12 = vector.broadcast %11 : vector<1x256xf32> to vector<128x256xf32>
    %13 = arith.addf %10, %12 : vector<128x256xf32>
    %c0_8 = arith.constant 0 : index
    %c0_9 = arith.constant 0 : index
    %14 = vector.load %arg5[%c0_8, %c0_9] : memref<128x256xf32, #tpu.memory_space<vmem>>, vector<128x256xf32>
    tpu.vector_store %arg5[%c0_8, %c0_9], %13 {strides = array<i32>} : memref<128x256xf32, #tpu.memory_space<vmem>>, vector<128x256xf32>,
    return
  }
  func.func @transform_0(%arg0: i32, %arg1: i32) -> (i32, i32) {
    %c0_i32 = arith.constant 0 : i32
    %c0_i32_0 = arith.constant 0 : i32
    return %arg0, %c0_i32 : i32, i32
  }
  func.func @transform_1(%arg0: i32, %arg1: i32) -> (i32, i32) {
    %c0_i32 = arith.constant 0 : i32
    %c0_i32_0 = arith.constant 0 : i32
    return %arg1, %c0_i32 : i32, i32
  }
  func.func @transform_2(%arg0: i32, %arg1: i32) -> (i32, i32) {
    %c0_i32 = arith.constant 0 : i32
    %c0_i32_0 = arith.constant 0 : i32
    return %c0_i32, %arg1 : i32, i32
  }
  func.func @transform_3(%arg0: i32, %arg1: i32) -> (i32, i32) {
    %c0_i32 = arith.constant 0 : i32
    return %arg0, %arg1 : i32, i32
  }
}

</mosaic_0001>

<llo_original>
// kernel: tpu_custom_call.1
$region0: #{tpu_custom_call.1}
  #allocation0 [shape = 'u32[]', space=smem, size = 0x4, offset = 0x4, fixed_abs, tag = 'smem constant byte address 0x4 - core index']
  #allocation1 [shape = 'u32[144,128]{1,0:T(1,128)}', space=vmem, size = 0x12000, scoped, tag = 'internal scratch']
  %s0 = inlined_call_operand.hbm [shape: f32[384,1024], index: 0, kind: input, shape index: {}]
  %s1 = inlined_call_operand.hbm [shape: f32[256,1024], index: 1, kind: input, shape index: {}]
  %s2 = inlined_call_operand.hbm [shape: f32[1,256], index: 2, kind: input, shape index: {}]
  %s3 = inlined_call_operand.hbm [shape: f32[384,256], index: 3, kind: output, shape index: {}]
  %s4 = sld [smem:[#allocation0]]
  $region57: #{tpu_custom_call.1} parent=0
    _
  %s6 = ssub.s32 1, %s4
  %s7 = scalar_select 0, %s6, %s4
  $region1: #{tpu_custom_call.1} parent=0
    #allocation2 [shape = 'u8[1048576]{0}', space=vmem, size = 0x100000, scoped, tag = 'input window, operand 0']
    #allocation3 [shape = 's32[2]{0}', space=sflag, size = 0x8, scoped, tag = 'scoped memory for tpu_custom_call.1']
    #allocation4 [shape = 's32[2]{0}', space=sflag, size = 0x8, scoped, tag = 'scoped memory for tpu_custom_call.1']
    #allocation5 [shape = 'u8[1048576]{0}', space=vmem, size = 0x100000, scoped, tag = 'input window, operand 1, single buffered']
    #allocation6 [shape = 's32[1]{0}', space=sflag, size = 0x4, scoped, tag = 'scoped memory for tpu_custom_call.1']
    #allocation7 [shape = 'u8[1024]{0}', space=vmem, size = 0x400, scoped, tag = 'input window, operand 2, single buffered']
    #allocation8 [shape = 'u8[262144]{0}', space=vmem, size = 0x40000, scoped, tag = 'output window, operand 0']
    %8 = vsyncpa [#allocation3], 0
    %s9 = scalar_lea.sflag [#allocation3], 1
    %10 = vsyncpa %s9, 0
    %11 = vsyncpa [#allocation6], 0
    %12 = vsyncpa [#allocation4], 0
    %s13 = scalar_lea.sflag [#allocation4], 1
    %14 = vsyncpa %s13, 0
    loop: start=0, step=1, limit=5
    $region2: #{tpu_custom_call.1} parent=1 // loop_pre_header
      _
    $region3: #{tpu_custom_call.1} parent=1 // loop_header
      %s16 = sphi 0, %s20
      %p17 = scmp.ge.s32.totalorder %s16, 5
      %s23 = sphi 0, %s35
      %s24 = sphi 0, %s31
      %s25 = sphi 0, %s23
      %s26 = sphi 0, %s24
      %s27 = sphi 0, %s25
      %s28 = sphi 0, %s26
      %s38 = sphi 0, %s40
      %s41 = sphi 0, %s38
      %s42 = sphi 0, %s41
      %s58 = sphi 0, %s42
      %s64 = sphi 0, %s66
      %s67 = sphi 0, %s64
      %s68 = sphi 0, %s67
      %s84 = sphi 0, %s68
      %s90 = sphi 0, %s92
      %s93 = sphi 0, %s90
      %s94 = sphi 0, %s93
      %s110 = sphi 0, %s94
      %s118 = sphi 0, %s120
      %s121 = sphi 0, %s118
      %s122 = sphi 0, %s121
      %s138 = sphi 0, %s122
    $region4: #{tpu_custom_call.1} parent=1 // loop_header_branch
      %19 = sbr.rel (%p17) target = $region8
    $region5: #{tpu_custom_call.1} parent=1 // loop_body
      %s21 = ssub.s32 %s16, 1
      %s22 = ssub.s32 %s16, 2
      %s29 = sadd.s32 1, %s24
      %p30 = scmp.ge.s32.totalorder %s29, 1
      %s31 = scalar_select %p30, 0, %s29
      %s32 = sadd.s32 1, %s23
      %s33 = scalar_select %p30, %s32, %s23
      %p34 = scmp.ge.s32.totalorder %s33, 3
      %s35 = scalar_select %p34, 0, %s33
      %s36 = ssub.s32 %s23, %s35
      %p37 = scmp.eq.s32.totalorder %s36, 0
      %s39 = sadd.s32 %s38, 1
      %s40 = scalar_select %p37, %s38, %s39
      %p43 = pneg %p37
      %p44 = scmp.eq.s32.totalorder %s16, 2
      %p45 = por %p43, %p44
      %p46 = scmp.ne.s32.totalorder %s38, %s41
      %p47 = scmp.eq.s32.totalorder %s16, 0
      %p48 = por %p46, %p47
      %p49 = scmp.ne.s32.totalorder %s38, %s41
      %p50 = scmp.eq.s32.totalorder %s21, 2
      %p51 = por %p49, %p50
      %p52 = scmp.ne.s32.totalorder %s41, %s42
      %p53 = scmp.eq.s32.totalorder %s21, 0
      %p54 = por %p52, %p53
      %p55 = scmp.ne.s32.totalorder %s41, %s42
      %p56 = scmp.eq.s32.totalorder %s22, 2
      %p57 = por %p55, %p56
      %p59 = scmp.ne.s32.totalorder %s42, %s58
      %p60 = scmp.eq.s32.totalorder %s22, 0
      %p61 = por %p59, %p60
      %s62 = ssub.s32 %s24, %s31
      %p63 = scmp.eq.s32.totalorder %s62, 0
      %s65 = sadd.s32 %s64, 1
      %s66 = scalar_select %p63, %s64, %s65
      %p69 = pneg %p63
      %p70 = scmp.eq.s32.totalorder %s16, 2
      %p71 = por %p69, %p70
      %p72 = scmp.ne.s32.totalorder %s64, %s67
      %p73 = scmp.eq.s32.totalorder %s16, 0
      %p74 = por %p72, %p73
      %p75 = scmp.ne.s32.totalorder %s64, %s67
      %p76 = scmp.eq.s32.totalorder %s21, 2
      %p77 = por %p75, %p76
      %p78 = scmp.ne.s32.totalorder %s67, %s68
      %p79 = scmp.eq.s32.totalorder %s21, 0
      %p80 = por %p78, %p79
      %p81 = scmp.ne.s32.totalorder %s67, %s68
      %p82 = scmp.eq.s32.totalorder %s22, 2
      %p83 = por %p81, %p82
      %p85 = scmp.ne.s32.totalorder %s68, %s84
      %p86 = scmp.eq.s32.totalorder %s22, 0
      %p87 = por %p85, %p86
      %s88 = ssub.s32 %s24, %s31
      %p89 = scmp.eq.s32.totalorder %s88, 0
      %s91 = sadd.s32 %s90, 1
      %s92 = scalar_select %p89, %s90, %s91
      %p95 = pneg %p89
      %p96 = scmp.eq.s32.totalorder %s16, 2
      %p97 = por %p95, %p96
      %p98 = scmp.ne.s32.totalorder %s90, %s93
      %p99 = scmp.eq.s32.totalorder %s16, 0
      %p100 = por %p98, %p99
      %p101 = scmp.ne.s32.totalorder %s90, %s93
      %p102 = scmp.eq.s32.totalorder %s21, 2
      %p103 = por %p101, %p102
      %p104 = scmp.ne.s32.totalorder %s93, %s94
      %p105 = scmp.eq.s32.totalorder %s21, 0
      %p106 = por %p104, %p105
      %p107 = scmp.ne.s32.totalorder %s93, %s94
      %p108 = scmp.eq.s32.totalorder %s22, 2
      %p109 = por %p107, %p108
      %p111 = scmp.ne.s32.totalorder %s94, %s110
      %p112 = scmp.eq.s32.totalorder %s22, 0
      %p113 = por %p111, %p112
      %s114 = ssub.s32 %s23, %s35
      %s115 = ssub.s32 %s24, %s31
      %s116 = sor.u32 %s114, %s115
      %p117 = scmp.eq.s32.totalorder %s116, 0
      %s119 = sadd.s32 %s118, 1
      %s120 = scalar_select %p117, %s118, %s119
      %p123 = pneg %p117
      %p124 = scmp.eq.s32.totalorder %s16, 2
      %p125 = por %p123, %p124
      %p126 = scmp.ne.s32.totalorder %s118, %s121
      %p127 = scmp.eq.s32.totalorder %s16, 0
      %p128 = por %p126, %p127
      %p129 = scmp.ne.s32.totalorder %s118, %s121
      %p130 = scmp.eq.s32.totalorder %s21, 2
      %p131 = por %p129, %p130
      %p132 = scmp.ne.s32.totalorder %s121, %s122
      %p133 = scmp.eq.s32.totalorder %s21, 0
      %p134 = por %p132, %p133
      %p135 = scmp.ne.s32.totalorder %s121, %s122
      %p136 = scmp.eq.s32.totalorder %s22, 2
      %p137 = por %p135, %p136
      %p139 = scmp.ne.s32.totalorder %s122, %s138
      %p140 = scmp.eq.s32.totalorder %s22, 0
      %p141 = por %p139, %p140
      %p142 = scmp.le.s32.totalorder 1, %s16
      %p143 = scmp.lt.s32.totalorder %s16, 4
      %p144 = pnand %p142, %p143
      %p145 = pneg %p144
      // Predicated region
      $region9: #{tpu_custom_call.1} parent=5 // pred_check
        _
      $region10: #{tpu_custom_call.1} parent=5 // pred_check_branch
        %147 = sbr.rel (%p144) target = $region12
      $region11: #{tpu_custom_call.1} parent=5 // pred_region
        %s148 = ssub.s32 %s16, 1
        // Predicated region
        $region13: #{tpu_custom_call.1} parent=11 // pred_check
          %p149 = pneg %p80
        $region14: #{tpu_custom_call.1} parent=11 // pred_check_branch
          %151 = sbr.rel (%p149) target = $region16
        $region15: #{tpu_custom_call.1} parent=11 // pred_region
          %s152 = smul.u32 32, %s26
          %s154 = ssub.s32 32768, 32768
          %155 = vsyncadd [#allocation6], %s154
          %s156 = smul.addr %s152, 8
          %s157 = smul.addr %s156, 128
          %s158 = scalar_lea.hbm %s1, %s157
          %s159 = sshll.u32 [#allocation5], 4
          %s160 = int_to_ptr.vmem [resolvable:$true] %s159
          %165 = dma.hbm_to_vmem [thread:$0]  %s158, 32768, %s160, [#allocation6], 1024, 1024, 64
        $region16: #{tpu_custom_call.1} parent=11 // pred_fallthru
          _
        // Predicated region
        $region17: #{tpu_custom_call.1} parent=11 // pred_check
          %p166 = pneg %p106
        $region18: #{tpu_custom_call.1} parent=11 // pred_check_branch
          %168 = sbr.rel (%p166) target = $region20
        $region19: #{tpu_custom_call.1} parent=11 // pred_region
          %s169 = smul.u32 2, %s26
          %s171 = ssub.s32 32, 32
          %172 = vsyncadd [#allocation6], %s171
          %s173 = smul.addr %s169, 16
          %s174 = scalar_lea.hbm %s2, %s173
          %s176 = sshll.u32 [#allocation7], 4
          %s177 = int_to_ptr.vmem [resolvable:$true] %s176
          %179 = dma.hbm_to_vmem [thread:$0]  %s174, 32, %s177, [#allocation6]
        $region20: #{tpu_custom_call.1} parent=11 // pred_fallthru
          _
      $region12: #{tpu_custom_call.1} parent=5 // pred_fallthru
        _
      %p180 = scmp.lt.s32.totalorder %s16, 3
      // Predicated region
      $region21: #{tpu_custom_call.1} parent=5 // pred_check
        %p181 = pneg %p180
      $region22: #{tpu_custom_call.1} parent=5 // pred_check_branch
        %183 = sbr.rel (%p181) target = $region24
      $region23: #{tpu_custom_call.1} parent=5 // pred_region
        // Predicated region
        $region25: #{tpu_custom_call.1} parent=23 // pred_check
          %p184 = pneg %p48
        $region26: #{tpu_custom_call.1} parent=23 // pred_check_branch
          %186 = sbr.rel (%p184) target = $region28
        $region27: #{tpu_custom_call.1} parent=23 // pred_region
          %s187 = sand.u32 %s38, 1
          %s188 = scalar_lea.sflag [#allocation3], %s187
          %s189 = sand.u32 %s38, 1
          %s190 = smul.addr %s189, 1024
          %s191 = scalar_lea.vmem [#allocation2], %s190
          %s192 = smul.u32 16, %s23
          %s194 = ssub.s32 16384, 16384
          %195 = vsyncadd %s188, %s194
          %s196 = smul.addr %s192, 8
          %s197 = smul.addr %s196, 128
          %s198 = scalar_lea.hbm %s0, %s197
          %s199 = sshll.u32 %s191, 4
          %s200 = int_to_ptr.vmem [resolvable:$true] %s199
          %205 = dma.hbm_to_vmem [thread:$0]  %s198, 16384, %s200, %s188, 1024, 1024, 64
        $region28: #{tpu_custom_call.1} parent=23 // pred_fallthru
          _
      $region24: #{tpu_custom_call.1} parent=5 // pred_fallthru
        _
      %p206 = scmp.le.s32.totalorder 1, %s16
      %p207 = scmp.lt.s32.totalorder %s16, 4
      %p208 = pnand %p206, %p207
      %p209 = pneg %p208
      // Predicated region
      $region29: #{tpu_custom_call.1} parent=5 // pred_check
        _
      $region30: #{tpu_custom_call.1} parent=5 // pred_check_branch
        %211 = sbr.rel (%p208) target = $region32
      $region31: #{tpu_custom_call.1} parent=5 // pred_region
        %s212 = ssub.s32 %s16, 1
        %s213 = sand.u32 %s41, 1
        %s214 = scalar_lea.sflag [#allocation3], %s213
        %s215 = sand.u32 %s41, 1
        %s216 = smul.addr %s215, 1024
        %s217 = scalar_lea.vmem [#allocation2], %s216
        // Predicated region
        $region33: #{tpu_custom_call.1} parent=31 // pred_check
          %p218 = pneg %p54
        $region34: #{tpu_custom_call.1} parent=31 // pred_check_branch
          %220 = sbr.rel (%p218) target = $region36
        $region35: #{tpu_custom_call.1} parent=31 // pred_region
          %221 = dma.done %s214, 16384
        $region36: #{tpu_custom_call.1} parent=31 // pred_fallthru
          _
        // Predicated region
        $region37: #{tpu_custom_call.1} parent=31 // pred_check
          %p222 = pneg %p80
        $region38: #{tpu_custom_call.1} parent=31 // pred_check_branch
          %224 = sbr.rel (%p222) target = $region40
        $region39: #{tpu_custom_call.1} parent=31 // pred_region
          %225 = dma.done [#allocation6], 32768
        $region40: #{tpu_custom_call.1} parent=31 // pred_fallthru
          _
        // Predicated region
        $region41: #{tpu_custom_call.1} parent=31 // pred_check
          %p226 = pneg %p106
        $region42: #{tpu_custom_call.1} parent=31 // pred_check_branch
          %228 = sbr.rel (%p226) target = $region44
        $region43: #{tpu_custom_call.1} parent=31 // pred_region
          %229 = dma.done [#allocation6], 32
        $region44: #{tpu_custom_call.1} parent=31 // pred_fallthru
          _
        %s230 = sand.u32 %s41, 1
        %s231 = scalar_lea.sflag [#allocation3], %s230
        %s232 = sand.u32 %s41, 1
        %s233 = smul.addr %s232, 1024
        %s234 = scalar_lea.vmem [#allocation2], %s233
        %p235 = pneg %p54
        %p236 = pneg %p51
        %p237 = pneg %p80
        %p238 = pneg %p77
        %p239 = pneg %p106
        %p240 = pneg %p103
        %p241 = pneg %p134
        %p242 = pneg %p131
        %s243 = sand.u32 %s121, 1
        %s244 = scalar_lea.sflag [#allocation4], %s243
        %s245 = sand.u32 %s121, 1
        %s246 = smul.addr %s245, 256
        %s247 = scalar_lea.vmem [#allocation8], %s246
        %s248 = smul.u32 16, %s25
        %s249 = smul.u32 32, %s26
        %s250 = smul.u32 2, %s26
        %s251 = smul.u32 16, %s25
        %s252 = smul.u32 2, %s26
        %v253 = vld [vmem:[%s217] sm:$0xff]
        %v254 = vld [vmem:[%s217 + $0x8] sm:$0xff]
        %v255 = vld [vmem:[%s217 + $0x10] sm:$0xff]
        %v256 = vld [vmem:[%s217 + $0x18] sm:$0xff]
        %v257 = vld [vmem:[%s217 + $0x20] sm:$0xff]
        %v258 = vld [vmem:[%s217 + $0x28] sm:$0xff]
        %v259 = vld [vmem:[%s217 + $0x30] sm:$0xff]
        %v260 = vld [vmem:[%s217 + $0x38] sm:$0xff]
        %v261 = vld [vmem:[%s217 + $0x40] sm:$0xff]
        %v262 = vld [vmem:[%s217 + $0x48] sm:$0xff]
        %v263 = vld [vmem:[%s217 + $0x50] sm:$0xff]
        %v264 = vld [vmem:[%s217 + $0x58] sm:$0xff]
        %v265 = vld [vmem:[%s217 + $0x60] sm:$0xff]
        %v266 = vld [vmem:[%s217 + $0x68] sm:$0xff]
        %v267 = vld [vmem:[%s217 + $0x70] sm:$0xff]
        %v268 = vld [vmem:[%s217 + $0x78] sm:$0xff]
        %v269 = vld [vmem:[%s217 + $0x80] sm:$0xff]
        %v270 = vld [vmem:[%s217 + $0x88] sm:$0xff]
        %v271 = vld [vmem:[%s217 + $0x90] sm:$0xff]
        %v272 = vld [vmem:[%s217 + $0x98] sm:$0xff]
        %v273 = vld [vmem:[%s217 + $0xa0] sm:$0xff]
        %v274 = vld [vmem:[%s217 + $0xa8] sm:$0xff]
        %v275 = vld [vmem:[%s217 + $0xb0] sm:$0xff]
        %v276 = vld [vmem:[%s217 + $0xb8] sm:$0xff]
        %v277 = vld [vmem:[%s217 + $0xc0] sm:$0xff]
        %v278 = vld [vmem:[%s217 + $0xc8] sm:$0xff]
        %v279 = vld [vmem:[%s217 + $0xd0] sm:$0xff]
        %v280 = vld [vmem:[%s217 + $0xd8] sm:$0xff]
        %v281 = vld [vmem:[%s217 + $0xe0] sm:$0xff]
        %v282 = vld [vmem:[%s217 + $0xe8] sm:$0xff]
        %v283 = vld [vmem:[%s217 + $0xf0] sm:$0xff]
        %v284 = vld [vmem:[%s217 + $0xf8] sm:$0xff]
        %v285 = vld [vmem:[%s217 + $0x100] sm:$0xff]
        %v286 = vld [vmem:[%s217 + $0x108] sm:$0xff]
        %v287 = vld [vmem:[%s217 + $0x110] sm:$0xff]
        %v288 = vld [vmem:[%s217 + $0x118] sm:$0xff]
        %v289 = vld [vmem:[%s217 + $0x120] sm:$0xff]
        %v290 = vld [vmem:[%s217 + $0x128] sm:$0xff]
        %v291 = vld [vmem:[%s217 + $0x130] sm:$0xff]
        %v292 = vld [vmem:[%s217 + $0x138] sm:$0xff]
        %v293 = vld [vmem:[%s217 + $0x140] sm:$0xff]
        %v294 = vld [vmem:[%s217 + $0x148] sm:$0xff]
        %v295 = vld [vmem:[%s217 + $0x150] sm:$0xff]
        %v296 = vld [vmem:[%s217 + $0x158] sm:$0xff]
        %v297 = vld [vmem:[%s217 + $0x160] sm:$0xff]
        %v298 = vld [vmem:[%s217 + $0x168] sm:$0xff]
        %v299 = vld [vmem:[%s217 + $0x170] sm:$0xff]
        %v300 = vld [vmem:[%s217 + $0x178] sm:$0xff]
        %v301 = vld [vmem:[%s217 + $0x180] sm:$0xff]
        %v302 = vld [vmem:[%s217 + $0x188] sm:$0xff]
        %v303 = vld [vmem:[%s217 + $0x190] sm:$0xff]
        %v304 = vld [vmem:[%s217 + $0x198] sm:$0xff]
        %v305 = vld [vmem:[%s217 + $0x1a0] sm:$0xff]
        %v306 = vld [vmem:[%s217 + $0x1a8] sm:$0xff]
        %v307 = vld [vmem:[%s217 + $0x1b0] sm:$0xff]
        %v308 = vld [vmem:[%s217 + $0x1b8] sm:$0xff]
        %v309 = vld [vmem:[%s217 + $0x1c0] sm:$0xff]
        %v310 = vld [vmem:[%s217 + $0x1c8] sm:$0xff]
        %v311 = vld [vmem:[%s217 + $0x1d0] sm:$0xff]
        %v312 = vld [vmem:[%s217 + $0x1d8] sm:$0xff]
        %v313 = vld [vmem:[%s217 + $0x1e0] sm:$0xff]
        %v314 = vld [vmem:[%s217 + $0x1e8] sm:$0xff]
        %v315 = vld [vmem:[%s217 + $0x1f0] sm:$0xff]
        %v316 = vld [vmem:[%s217 + $0x1f8] sm:$0xff]
        %v317 = vld [vmem:[%s217 + $0x200] sm:$0xff]
        %v318 = vld [vmem:[%s217 + $0x208] sm:$0xff]
        %v319 = vld [vmem:[%s217 + $0x210] sm:$0xff]
        %v320 = vld [vmem:[%s217 + $0x218] sm:$0xff]
        %v321 = vld [vmem:[%s217 + $0x220] sm:$0xff]
        %v322 = vld [vmem:[%s217 + $0x228] sm:$0xff]
        %v323 = vld [vmem:[%s217 + $0x230] sm:$0xff]
        %v324 = vld [vmem:[%s217 + $0x238] sm:$0xff]
        %v325 = vld [vmem:[%s217 + $0x240] sm:$0xff]
        %v326 = vld [vmem:[%s217 + $0x248] sm:$0xff]
        %v327 = vld [vmem:[%s217 + $0x250] sm:$0xff]
        %v328 = vld [vmem:[%s217 + $0x258] sm:$0xff]
        %v329 = vld [vmem:[%s217 + $0x260] sm:$0xff]
        %v330 = vld [vmem:[%s217 + $0x268] sm:$0xff]
        %v331 = vld [vmem:[%s217 + $0x270] sm:$0xff]
        %v332 = vld [vmem:[%s217 + $0x278] sm:$0xff]
        %v333 = vld [vmem:[%s217 + $0x280] sm:$0xff]
        %v334 = vld [vmem:[%s217 + $0x288] sm:$0xff]
        %v335 = vld [vmem:[%s217 + $0x290] sm:$0xff]
        %v336 = vld [vmem:[%s217 + $0x298] sm:$0xff]
        %v337 = vld [vmem:[%s217 + $0x2a0] sm:$0xff]
        %v338 = vld [vmem:[%s217 + $0x2a8] sm:$0xff]
        %v339 = vld [vmem:[%s217 + $0x2b0] sm:$0xff]
        %v340 = vld [vmem:[%s217 + $0x2b8] sm:$0xff]
        %v341 = vld [vmem:[%s217 + $0x2c0] sm:$0xff]
        %v342 = vld [vmem:[%s217 + $0x2c8] sm:$0xff]
        %v343 = vld [vmem:[%s217 + $0x2d0] sm:$0xff]
        %v344 = vld [vmem:[%s217 + $0x2d8] sm:$0xff]
        %v345 = vld [vmem:[%s217 + $0x2e0] sm:$0xff]
        %v346 = vld [vmem:[%s217 + $0x2e8] sm:$0xff]
        %v347 = vld [vmem:[%s217 + $0x2f0] sm:$0xff]
        %v348 = vld [vmem:[%s217 + $0x2f8] sm:$0xff]
        %v349 = vld [vmem:[%s217 + $0x300] sm:$0xff]
        %v350 = vld [vmem:[%s217 + $0x308] sm:$0xff]
        %v351 = vld [vmem:[%s217 + $0x310] sm:$0xff]
        %v352 = vld [vmem:[%s217 + $0x318] sm:$0xff]
        %v353 = vld [vmem:[%s217 + $0x320] sm:$0xff]
        %v354 = vld [vmem:[%s217 + $0x328] sm:$0xff]
        %v355 = vld [vmem:[%s217 + $0x330] sm:$0xff]
        %v356 = vld [vmem:[%s217 + $0x338] sm:$0xff]
        %v357 = vld [vmem:[%s217 + $0x340] sm:$0xff]
        %v358 = vld [vmem:[%s217 + $0x348] sm:$0xff]
        %v359 = vld [vmem:[%s217 + $0x350] sm:$0xff]
        %v360 = vld [vmem:[%s217 + $0x358] sm:$0xff]
        %v361 = vld [vmem:[%s217 + $0x360] sm:$0xff]
        %v362 = vld [vmem:[%s217 + $0x368] sm:$0xff]
        %v363 = vld [vmem:[%s217 + $0x370] sm:$0xff]
        %v364 = vld [vmem:[%s217 + $0x378] sm:$0xff]
        %v365 = vld [vmem:[%s217 + $0x380] sm:$0xff]
        %v366 = vld [vmem:[%s217 + $0x388] sm:$0xff]
        %v367 = vld [vmem:[%s217 + $0x390] sm:$0xff]
        %v368 = vld [vmem:[%s217 + $0x398] sm:$0xff]
        %v369 = vld [vmem:[%s217 + $0x3a0] sm:$0xff]
        %v370 = vld [vmem:[%s217 + $0x3a8] sm:$0xff]
        %v371 = vld [vmem:[%s217 + $0x3b0] sm:$0xff]
        %v372 = vld [vmem:[%s217 + $0x3b8] sm:$0xff]
        %v373 = vld [vmem:[%s217 + $0x3c0] sm:$0xff]
        %v374 = vld [vmem:[%s217 + $0x3c8] sm:$0xff]
        %v375 = vld [vmem:[%s217 + $0x3d0] sm:$0xff]
        %v376 = vld [vmem:[%s217 + $0x3d8] sm:$0xff]
        %v377 = vld [vmem:[%s217 + $0x3e0] sm:$0xff]
        %v378 = vld [vmem:[%s217 + $0x3e8] sm:$0xff]
        %v379 = vld [vmem:[%s217 + $0x3f0] sm:$0xff]
        %v380 = vld [vmem:[%s217 + $0x3f8] sm:$0xff]
        %v381 = vmul.f32 %v253, 0.5
        %v382 = vmul.f32 %v254, 0.5
        %v383 = vmul.f32 %v255, 0.5
        %v384 = vmul.f32 %v256, 0.5
        %v385 = vmul.f32 %v257, 0.5
        %v386 = vmul.f32 %v258, 0.5
        %v387 = vmul.f32 %v259, 0.5
        %v388 = vmul.f32 %v260, 0.5
        %v389 = vmul.f32 %v261, 0.5
        %v390 = vmul.f32 %v262, 0.5
        %v391 = vmul.f32 %v263, 0.5
        %v392 = vmul.f32 %v264, 0.5
        %v393 = vmul.f32 %v265, 0.5
        %v394 = vmul.f32 %v266, 0.5
        %v395 = vmul.f32 %v267, 0.5
        %v396 = vmul.f32 %v268, 0.5
        %v397 = vmul.f32 %v269, 0.5
        %v398 = vmul.f32 %v270, 0.5
        %v399 = vmul.f32 %v271, 0.5
        %v400 = vmul.f32 %v272, 0.5
        %v401 = vmul.f32 %v273, 0.5
        %v402 = vmul.f32 %v274, 0.5
        %v403 = vmul.f32 %v275, 0.5
        %v404 = vmul.f32 %v276, 0.5
        %v405 = vmul.f32 %v277, 0.5
        %v406 = vmul.f32 %v278, 0.5
        %v407 = vmul.f32 %v279, 0.5
        %v408 = vmul.f32 %v280, 0.5
        %v409 = vmul.f32 %v281, 0.5
        %v410 = vmul.f32 %v282, 0.5
        %v411 = vmul.f32 %v283, 0.5
        %v412 = vmul.f32 %v284, 0.5
        %v413 = vmul.f32 %v285, 0.5
        %v414 = vmul.f32 %v286, 0.5
        %v415 = vmul.f32 %v287, 0.5
        %v416 = vmul.f32 %v288, 0.5
        %v417 = vmul.f32 %v289, 0.5
        %v418 = vmul.f32 %v290, 0.5
        %v419 = vmul.f32 %v291, 0.5
        %v420 = vmul.f32 %v292, 0.5
        %v421 = vmul.f32 %v293, 0.5
        %v422 = vmul.f32 %v294, 0.5
        %v423 = vmul.f32 %v295, 0.5
        %v424 = vmul.f32 %v296, 0.5
        %v425 = vmul.f32 %v297, 0.5
        %v426 = vmul.f32 %v298, 0.5
        %v427 = vmul.f32 %v299, 0.5
        %v428 = vmul.f32 %v300, 0.5
        %v429 = vmul.f32 %v301, 0.5
        %v430 = vmul.f32 %v302, 0.5
        %v431 = vmul.f32 %v303, 0.5
        %v432 = vmul.f32 %v304, 0.5
        %v433 = vmul.f32 %v305, 0.5
        %v434 = vmul.f32 %v306, 0.5
        %v435 = vmul.f32 %v307, 0.5
        %v436 = vmul.f32 %v308, 0.5
        %v437 = vmul.f32 %v309, 0.5
        %v438 = vmul.f32 %v310, 0.5
        %v439 = vmul.f32 %v311, 0.5
        %v440 = vmul.f32 %v312, 0.5
        %v441 = vmul.f32 %v313, 0.5
        %v442 = vmul.f32 %v314, 0.5
        %v443 = vmul.f32 %v315, 0.5
        %v444 = vmul.f32 %v316, 0.5
        %v445 = vmul.f32 %v317, 0.5
        %v446 = vmul.f32 %v318, 0.5
        %v447 = vmul.f32 %v319, 0.5
        %v448 = vmul.f32 %v320, 0.5
        %v449 = vmul.f32 %v321, 0.5
        %v450 = vmul.f32 %v322, 0.5
        %v451 = vmul.f32 %v323, 0.5
        %v452 = vmul.f32 %v324, 0.5
        %v453 = vmul.f32 %v325, 0.5
        %v454 = vmul.f32 %v326, 0.5
        %v455 = vmul.f32 %v327, 0.5
        %v456 = vmul.f32 %v328, 0.5
        %v457 = vmul.f32 %v329, 0.5
        %v458 = vmul.f32 %v330, 0.5
        %v459 = vmul.f32 %v331, 0.5
        %v460 = vmul.f32 %v332, 0.5
        %v461 = vmul.f32 %v333, 0.5
        %v462 = vmul.f32 %v334, 0.5
        %v463 = vmul.f32 %v335, 0.5
        %v464 = vmul.f32 %v336, 0.5
        %v465 = vmul.f32 %v337, 0.5
        %v466 = vmul.f32 %v338, 0.5
        %v467 = vmul.f32 %v339, 0.5
        %v468 = vmul.f32 %v340, 0.5
        %v469 = vmul.f32 %v341, 0.5
        %v470 = vmul.f32 %v342, 0.5
        %v471 = vmul.f32 %v343, 0.5
        %v472 = vmul.f32 %v344, 0.5
        %v473 = vmul.f32 %v345, 0.5
        %v474 = vmul.f32 %v346, 0.5
        %v475 = vmul.f32 %v347, 0.5
        %v476 = vmul.f32 %v348, 0.5
        %v477 = vmul.f32 %v349, 0.5
        %v478 = vmul.f32 %v350, 0.5
        %v479 = vmul.f32 %v351, 0.5
        %v480 = vmul.f32 %v352, 0.5
        %v481 = vmul.f32 %v353, 0.5
        %v482 = vmul.f32 %v354, 0.5
        %v483 = vmul.f32 %v355, 0.5
        %v484 = vmul.f32 %v356, 0.5
        %v485 = vmul.f32 %v357, 0.5
        %v486 = vmul.f32 %v358, 0.5
        %v487 = vmul.f32 %v359, 0.5
        %v488 = vmul.f32 %v360, 0.5
        %v489 = vmul.f32 %v361, 0.5
        %v490 = vmul.f32 %v362, 0.5
        %v491 = vmul.f32 %v363, 0.5
        %v492 = vmul.f32 %v364, 0.5
        %v493 = vmul.f32 %v365, 0.5
        %v494 = vmul.f32 %v366, 0.5
        %v495 = vmul.f32 %v367, 0.5
        %v496 = vmul.f32 %v368, 0.5
        %v497 = vmul.f32 %v369, 0.5
        %v498 = vmul.f32 %v370, 0.5
        %v499 = vmul.f32 %v371, 0.5
        %v500 = vmul.f32 %v372, 0.5
        %v501 = vmul.f32 %v373, 0.5
        %v502 = vmul.f32 %v374, 0.5
        %v503 = vmul.f32 %v375, 0.5
        %v504 = vmul.f32 %v376, 0.5
        %v505 = vmul.f32 %v377, 0.5
        %v506 = vmul.f32 %v378, 0.5
        %v507 = vmul.f32 %v379, 0.5
        %v508 = vmul.f32 %v380, 0.5
        %v509 = vmul.f32 %v253, 0.70710677
        %v510 = vmul.f32 %v254, 0.70710677
        %v511 = vmul.f32 %v255, 0.70710677
        %v512 = vmul.f32 %v256, 0.70710677
        %v513 = vmul.f32 %v257, 0.70710677
        %v514 = vmul.f32 %v258, 0.70710677
        %v515 = vmul.f32 %v259, 0.70710677
        %v516 = vmul.f32 %v260, 0.70710677
        %v517 = vmul.f32 %v261, 0.70710677
        %v518 = vmul.f32 %v262, 0.70710677
        %v519 = vmul.f32 %v263, 0.70710677
        %v520 = vmul.f32 %v264, 0.70710677
        %v521 = vmul.f32 %v265, 0.70710677
        %v522 = vmul.f32 %v266, 0.70710677
        %v523 = vmul.f32 %v267, 0.70710677
        %v524 = vmul.f32 %v268, 0.70710677
        %v525 = vmul.f32 %v269, 0.70710677
        %v526 = vmul.f32 %v270, 0.70710677
        %v527 = vmul.f32 %v271, 0.70710677
        %v528 = vmul.f32 %v272, 0.70710677
        %v529 = vmul.f32 %v273, 0.70710677
        %v530 = vmul.f32 %v274, 0.70710677
        %v531 = vmul.f32 %v275, 0.70710677
        %v532 = vmul.f32 %v276, 0.70710677
        %v533 = vmul.f32 %v277, 0.70710677
        %v534 = vmul.f32 %v278, 0.70710677
        %v535 = vmul.f32 %v279, 0.70710677
        %v536 = vmul.f32 %v280, 0.70710677
        %v537 = vmul.f32 %v281, 0.70710677
        %v538 = vmul.f32 %v282, 0.70710677
        %v539 = vmul.f32 %v283, 0.70710677
        %v540 = vmul.f32 %v284, 0.70710677
        %v541 = vmul.f32 %v285, 0.70710677
        %v542 = vmul.f32 %v286, 0.70710677
        %v543 = vmul.f32 %v287, 0.70710677
        %v544 = vmul.f32 %v288, 0.70710677
        %v545 = vmul.f32 %v289, 0.70710677
        %v546 = vmul.f32 %v290, 0.70710677
        %v547 = vmul.f32 %v291, 0.70710677
        %v548 = vmul.f32 %v292, 0.70710677
        %v549 = vmul.f32 %v293, 0.70710677
        %v550 = vmul.f32 %v294, 0.70710677
        %v551 = vmul.f32 %v295, 0.70710677
        %v552 = vmul.f32 %v296, 0.70710677
        %v553 = vmul.f32 %v297, 0.70710677
        %v554 = vmul.f32 %v298, 0.70710677
        %v555 = vmul.f32 %v299, 0.70710677
        %v556 = vmul.f32 %v300, 0.70710677
        %v557 = vmul.f32 %v301, 0.70710677
        %v558 = vmul.f32 %v302, 0.70710677
        %v559 = vmul.f32 %v303, 0.70710677
        %v560 = vmul.f32 %v304, 0.70710677
        %v561 = vmul.f32 %v305, 0.70710677
        %v562 = vmul.f32 %v306, 0.70710677
        %v563 = vmul.f32 %v307, 0.70710677
        %v564 = vmul.f32 %v308, 0.70710677
        %v565 = vmul.f32 %v309, 0.70710677
        %v566 = vmul.f32 %v310, 0.70710677
        %v567 = vmul.f32 %v311, 0.70710677
        %v568 = vmul.f32 %v312, 0.70710677
        %v569 = vmul.f32 %v313, 0.70710677
        %v570 = vmul.f32 %v314, 0.70710677
        %v571 = vmul.f32 %v315, 0.70710677
        %v572 = vmul.f32 %v316, 0.70710677
        %v573 = vmul.f32 %v317, 0.70710677
        %v574 = vmul.f32 %v318, 0.70710677
        %v575 = vmul.f32 %v319, 0.70710677
        %v576 = vmul.f32 %v320, 0.70710677
        %v577 = vmul.f32 %v321, 0.70710677
        %v578 = vmul.f32 %v322, 0.70710677
        %v579 = vmul.f32 %v323, 0.70710677
        %v580 = vmul.f32 %v324, 0.70710677
        %v581 = vmul.f32 %v325, 0.70710677
        %v582 = vmul.f32 %v326, 0.70710677
        %v583 = vmul.f32 %v327, 0.70710677
        %v584 = vmul.f32 %v328, 0.70710677
        %v585 = vmul.f32 %v329, 0.70710677
        %v586 = vmul.f32 %v330, 0.70710677
        %v587 = vmul.f32 %v331, 0.70710677
        %v588 = vmul.f32 %v332, 0.70710677
        %v589 = vmul.f32 %v333, 0.70710677
        %v590 = vmul.f32 %v334, 0.70710677
        %v591 = vmul.f32 %v335, 0.70710677
        %v592 = vmul.f32 %v336, 0.70710677
        %v593 = vmul.f32 %v337, 0.70710677
        %v594 = vmul.f32 %v338, 0.70710677
        %v595 = vmul.f32 %v339, 0.70710677
        %v596 = vmul.f32 %v340, 0.70710677
        %v597 = vmul.f32 %v341, 0.70710677
        %v598 = vmul.f32 %v342, 0.70710677
        %v599 = vmul.f32 %v343, 0.70710677
        %v600 = vmul.f32 %v344, 0.70710677
        %v601 = vmul.f32 %v345, 0.70710677
        %v602 = vmul.f32 %v346, 0.70710677
        %v603 = vmul.f32 %v347, 0.70710677
        %v604 = vmul.f32 %v348, 0.70710677
        %v605 = vmul.f32 %v349, 0.70710677
        %v606 = vmul.f32 %v350, 0.70710677
        %v607 = vmul.f32 %v351, 0.70710677
        %v608 = vmul.f32 %v352, 0.70710677
        %v609 = vmul.f32 %v353, 0.70710677
        %v610 = vmul.f32 %v354, 0.70710677
        %v611 = vmul.f32 %v355, 0.70710677
        %v612 = vmul.f32 %v356, 0.70710677
        %v613 = vmul.f32 %v357, 0.70710677
        %v614 = vmul.f32 %v358, 0.70710677
        %v615 = vmul.f32 %v359, 0.70710677
        %v616 = vmul.f32 %v360, 0.70710677
        %v617 = vmul.f32 %v361, 0.70710677
        %v618 = vmul.f32 %v362, 0.70710677
        %v619 = vmul.f32 %v363, 0.70710677
        %v620 = vmul.f32 %v364, 0.70710677
        %v621 = vmul.f32 %v365, 0.70710677
        %v622 = vmul.f32 %v366, 0.70710677
        %v623 = vmul.f32 %v367, 0.70710677
        %v624 = vmul.f32 %v368, 0.70710677
        %v625 = vmul.f32 %v369, 0.70710677
        %v626 = vmul.f32 %v370, 0.70710677
        %v627 = vmul.f32 %v371, 0.70710677
        %v628 = vmul.f32 %v372, 0.70710677
        %v629 = vmul.f32 %v373, 0.70710677
        %v630 = vmul.f32 %v374, 0.70710677
        %v631 = vmul.f32 %v375, 0.70710677
        %v632 = vmul.f32 %v376, 0.70710677
        %v633 = vmul.f32 %v377, 0.70710677
        %v634 = vmul.f32 %v378, 0.70710677
        %v635 = vmul.f32 %v379, 0.70710677
        %v636 = vmul.f32 %v380, 0.70710677
        %v637 = verf.f32.pop %v509
        %v638 = verf.f32.pop %v510
        %v639 = verf.f32.pop %v511
        %v640 = verf.f32.pop %v512
        %v641 = verf.f32.pop %v513
        %v642 = verf.f32.pop %v514
        %v643 = verf.f32.pop %v515
        %v644 = verf.f32.pop %v516
        %v645 = verf.f32.pop %v517
        %v646 = verf.f32.pop %v518
        %v647 = verf.f32.pop %v519
        %v648 = verf.f32.pop %v520
        %v649 = verf.f32.pop %v521
        %v650 = verf.f32.pop %v522
        %v651 = verf.f32.pop %v523
        %v652 = verf.f32.pop %v524
        %v653 = verf.f32.pop %v525
        %v654 = verf.f32.pop %v526
        %v655 = verf.f32.pop %v527
        %v656 = verf.f32.pop %v528
        %v657 = verf.f32.pop %v529
        %v658 = verf.f32.pop %v530
        %v659 = verf.f32.pop %v531
        %v660 = verf.f32.pop %v532
        %v661 = verf.f32.pop %v533
        %v662 = verf.f32.pop %v534
        %v663 = verf.f32.pop %v535
        %v664 = verf.f32.pop %v536
        %v665 = verf.f32.pop %v537
        %v666 = verf.f32.pop %v538
        %v667 = verf.f32.pop %v539
        %v668 = verf.f32.pop %v540
        %v669 = verf.f32.pop %v541
        %v670 = verf.f32.pop %v542
        %v671 = verf.f32.pop %v543
        %v672 = verf.f32.pop %v544
        %v673 = verf.f32.pop %v545
        %v674 = verf.f32.pop %v546
        %v675 = verf.f32.pop %v547
        %v676 = verf.f32.pop %v548
        %v677 = verf.f32.pop %v549
        %v678 = verf.f32.pop %v550
        %v679 = verf.f32.pop %v551
        %v680 = verf.f32.pop %v552
        %v681 = verf.f32.pop %v553
        %v682 = verf.f32.pop %v554
        %v683 = verf.f32.pop %v555
        %v684 = verf.f32.pop %v556
        %v685 = verf.f32.pop %v557
        %v686 = verf.f32.pop %v558
        %v687 = verf.f32.pop %v559
        %v688 = verf.f32.pop %v560
        %v689 = verf.f32.pop %v561
        %v690 = verf.f32.pop %v562
        %v691 = verf.f32.pop %v563
        %v692 = verf.f32.pop %v564
        %v693 = verf.f32.pop %v565
        %v694 = verf.f32.pop %v566
        %v695 = verf.f32.pop %v567
        %v696 = verf.f32.pop %v568
        %v697 = verf.f32.pop %v569
        %v698 = verf.f32.pop %v570
        %v699 = verf.f32.pop %v571
        %v700 = verf.f32.pop %v572
        %v701 = verf.f32.pop %v573
        %v702 = verf.f32.pop %v574
        %v703 = verf.f32.pop %v575
        %v704 = verf.f32.pop %v576
        %v705 = verf.f32.pop %v577
        %v706 = verf.f32.pop %v578
        %v707 = verf.f32.pop %v579
        %v708 = verf.f32.pop %v580
        %v709 = verf.f32.pop %v581
        %v710 = verf.f32.pop %v582
        %v711 = verf.f32.pop %v583
        %v712 = verf.f32.pop %v584
        %v713 = verf.f32.pop %v585
        %v714 = verf.f32.pop %v586
        %v715 = verf.f32.pop %v587
        %v716 = verf.f32.pop %v588
        %v717 = verf.f32.pop %v589
        %v718 = verf.f32.pop %v590
        %v719 = verf.f32.pop %v591
        %v720 = verf.f32.pop %v592
        %v721 = verf.f32.pop %v593
        %v722 = verf.f32.pop %v594
        %v723 = verf.f32.pop %v595
        %v724 = verf.f32.pop %v596
        %v725 = verf.f32.pop %v597
        %v726 = verf.f32.pop %v598
        %v727 = verf.f32.pop %v599
        %v728 = verf.f32.pop %v600
        %v729 = verf.f32.pop %v601
        %v730 = verf.f32.pop %v602
        %v731 = verf.f32.pop %v603
        %v732 = verf.f32.pop %v604
        %v733 = verf.f32.pop %v605
        %v734 = verf.f32.pop %v606
        %v735 = verf.f32.pop %v607
        %v736 = verf.f32.pop %v608
        %v737 = verf.f32.pop %v609
        %v738 = verf.f32.pop %v610
        %v739 = verf.f32.pop %v611
        %v740 = verf.f32.pop %v612
        %v741 = verf.f32.pop %v613
        %v742 = verf.f32.pop %v614
        %v743 = verf.f32.pop %v615
        %v744 = verf.f32.pop %v616
        %v745 = verf.f32.pop %v617
        %v746 = verf.f32.pop %v618
        %v747 = verf.f32.pop %v619
        %v748 = verf.f32.pop %v620
        %v749 = verf.f32.pop %v621
        %v750 = verf.f32.pop %v622
        %v751 = verf.f32.pop %v623
        %v752 = verf.f32.pop %v624
        %v753 = verf.f32.pop %v625
        %v754 = verf.f32.pop %v626
        %v755 = verf.f32.pop %v627
        %v756 = verf.f32.pop %v628
        %v757 = verf.f32.pop %v629
        %v758 = verf.f32.pop %v630
        %v759 = verf.f32.pop %v631
        %v760 = verf.f32.pop %v632
        %v761 = verf.f32.pop %v633
        %v762 = verf.f32.pop %v634
        %v763 = verf.f32.pop %v635
        %v764 = verf.f32.pop %v636
        %v765 = vadd.f32 %v637, 1.0
        %v766 = vadd.f32 %v638, 1.0
        %v767 = vadd.f32 %v639, 1.0
        %v768 = vadd.f32 %v640, 1.0
        %v769 = vadd.f32 %v641, 1.0
        %v770 = vadd.f32 %v642, 1.0
        %v771 = vadd.f32 %v643, 1.0
        %v772 = vadd.f32 %v644, 1.0
        %v773 = vadd.f32 %v645, 1.0
        %v774 = vadd.f32 %v646, 1.0
        %v775 = vadd.f32 %v647, 1.0
        %v776 = vadd.f32 %v648, 1.0
        %v777 = vadd.f32 %v649, 1.0
        %v778 = vadd.f32 %v650, 1.0
        %v779 = vadd.f32 %v651, 1.0
        %v780 = vadd.f32 %v652, 1.0
        %v781 = vadd.f32 %v653, 1.0
        %v782 = vadd.f32 %v654, 1.0
        %v783 = vadd.f32 %v655, 1.0
        %v784 = vadd.f32 %v656, 1.0
        %v785 = vadd.f32 %v657, 1.0
        %v786 = vadd.f32 %v658, 1.0
        %v787 = vadd.f32 %v659, 1.0
        %v788 = vadd.f32 %v660, 1.0
        %v789 = vadd.f32 %v661, 1.0
        %v790 = vadd.f32 %v662, 1.0
        %v791 = vadd.f32 %v663, 1.0
        %v792 = vadd.f32 %v664, 1.0
        %v793 = vadd.f32 %v665, 1.0
        %v794 = vadd.f32 %v666, 1.0
        %v795 = vadd.f32 %v667, 1.0
        %v796 = vadd.f32 %v668, 1.0
        %v797 = vadd.f32 %v669, 1.0
        %v798 = vadd.f32 %v670, 1.0
        %v799 = vadd.f32 %v671, 1.0
        %v800 = vadd.f32 %v672, 1.0
        %v801 = vadd.f32 %v673, 1.0
        %v802 = vadd.f32 %v674, 1.0
        %v803 = vadd.f32 %v675, 1.0
        %v804 = vadd.f32 %v676, 1.0
        %v805 = vadd.f32 %v677, 1.0
        %v806 = vadd.f32 %v678, 1.0
        %v807 = vadd.f32 %v679, 1.0
        %v808 = vadd.f32 %v680, 1.0
        %v809 = vadd.f32 %v681, 1.0
        %v810 = vadd.f32 %v682, 1.0
        %v811 = vadd.f32 %v683, 1.0
        %v812 = vadd.f32 %v684, 1.0
        %v813 = vadd.f32 %v685, 1.0
        %v814 = vadd.f32 %v686, 1.0
        %v815 = vadd.f32 %v687, 1.0
        %v816 = vadd.f32 %v688, 1.0
        %v817 = vadd.f32 %v689, 1.0
        %v818 = vadd.f32 %v690, 1.0
        %v819 = vadd.f32 %v691, 1.0
        %v820 = vadd.f32 %v692, 1.0
        %v821 = vadd.f32 %v693, 1.0
        %v822 = vadd.f32 %v694, 1.0
        %v823 = vadd.f32 %v695, 1.0
        %v824 = vadd.f32 %v696, 1.0
        %v825 = vadd.f32 %v697, 1.0
        %v826 = vadd.f32 %v698, 1.0
        %v827 = vadd.f32 %v699, 1.0
        %v828 = vadd.f32 %v700, 1.0
        %v829 = vadd.f32 %v701, 1.0
        %v830 = vadd.f32 %v702, 1.0
        %v831 = vadd.f32 %v703, 1.0
        %v832 = vadd.f32 %v704, 1.0
        %v833 = vadd.f32 %v705, 1.0
        %v834 = vadd.f32 %v706, 1.0
        %v835 = vadd.f32 %v707, 1.0
        %v836 = vadd.f32 %v708, 1.0
        %v837 = vadd.f32 %v709, 1.0
        %v838 = vadd.f32 %v710, 1.0
        %v839 = vadd.f32 %v711, 1.0
        %v840 = vadd.f32 %v712, 1.0
        %v841 = vadd.f32 %v713, 1.0
        %v842 = vadd.f32 %v714, 1.0
        %v843 = vadd.f32 %v715, 1.0
        %v844 = vadd.f32 %v716, 1.0
        %v845 = vadd.f32 %v717, 1.0
        %v846 = vadd.f32 %v718, 1.0
        %v847 = vadd.f32 %v719, 1.0
        %v848 = vadd.f32 %v720, 1.0
        %v849 = vadd.f32 %v721, 1.0
        %v850 = vadd.f32 %v722, 1.0
        %v851 = vadd.f32 %v723, 1.0
        %v852 = vadd.f32 %v724, 1.0
        %v853 = vadd.f32 %v725, 1.0
        %v854 = vadd.f32 %v726, 1.0
        %v855 = vadd.f32 %v727, 1.0
        %v856 = vadd.f32 %v728, 1.0
        %v857 = vadd.f32 %v729, 1.0
        %v858 = vadd.f32 %v730, 1.0
        %v859 = vadd.f32 %v731, 1.0
        %v860 = vadd.f32 %v732, 1.0
        %v861 = vadd.f32 %v733, 1.0
        %v862 = vadd.f32 %v734, 1.0
        %v863 = vadd.f32 %v735, 1.0
        %v864 = vadd.f32 %v736, 1.0
        %v865 = vadd.f32 %v737, 1.0
        %v866 = vadd.f32 %v738, 1.0
        %v867 = vadd.f32 %v739, 1.0
        %v868 = vadd.f32 %v740, 1.0
        %v869 = vadd.f32 %v741, 1.0
        %v870 = vadd.f32 %v742, 1.0
        %v871 = vadd.f32 %v743, 1.0
        %v872 = vadd.f32 %v744, 1.0
        %v873 = vadd.f32 %v745, 1.0
        %v874 = vadd.f32 %v746, 1.0
        %v875 = vadd.f32 %v747, 1.0
        %v876 = vadd.f32 %v748, 1.0
        %v877 = vadd.f32 %v749, 1.0
        %v878 = vadd.f32 %v750, 1.0
        %v879 = vadd.f32 %v751, 1.0
        %v880 = vadd.f32 %v752, 1.0
        %v881 = vadd.f32 %v753, 1.0
        %v882 = vadd.f32 %v754, 1.0
        %v883 = vadd.f32 %v755, 1.0
        %v884 = vadd.f32 %v756, 1.0
        %v885 = vadd.f32 %v757, 1.0
        %v886 = vadd.f32 %v758, 1.0
        %v887 = vadd.f32 %v759, 1.0
        %v888 = vadd.f32 %v760, 1.0
        %v889 = vadd.f32 %v761, 1.0
        %v890 = vadd.f32 %v762, 1.0
        %v891 = vadd.f32 %v763, 1.0
        %v892 = vadd.f32 %v764, 1.0
        %v893 = vmul.f32 %v381, %v765
        %v894 = vmul.f32 %v382, %v766
        %v895 = vmul.f32 %v383, %v767
        %v896 = vmul.f32 %v384, %v768
        %v897 = vmul.f32 %v385, %v769
        %v898 = vmul.f32 %v386, %v770
        %v899 = vmul.f32 %v387, %v771
        %v900 = vmul.f32 %v388, %v772
        %v901 = vmul.f32 %v389, %v773
        %v902 = vmul.f32 %v390, %v774
        %v903 = vmul.f32 %v391, %v775
        %v904 = vmul.f32 %v392, %v776
        %v905 = vmul.f32 %v393, %v777
        %v906 = vmul.f32 %v394, %v778
        %v907 = vmul.f32 %v395, %v779
        %v908 = vmul.f32 %v396, %v780
        %v909 = vmul.f32 %v397, %v781
        %v910 = vmul.f32 %v398, %v782
        %v911 = vmul.f32 %v399, %v783
        %v912 = vmul.f32 %v400, %v784
        %v913 = vmul.f32 %v401, %v785
        %v914 = vmul.f32 %v402, %v786
        %v915 = vmul.f32 %v403, %v787
        %v916 = vmul.f32 %v404, %v788
        %v917 = vmul.f32 %v405, %v789
        %v918 = vmul.f32 %v406, %v790
        %v919 = vmul.f32 %v407, %v791
        %v920 = vmul.f32 %v408, %v792
        %v921 = vmul.f32 %v409, %v793
        %v922 = vmul.f32 %v410, %v794
        %v923 = vmul.f32 %v411, %v795
        %v924 = vmul.f32 %v412, %v796
        %v925 = vmul.f32 %v413, %v797
        %v926 = vmul.f32 %v414, %v798
        %v927 = vmul.f32 %v415, %v799
        %v928 = vmul.f32 %v416, %v800
        %v929 = vmul.f32 %v417, %v801
        %v930 = vmul.f32 %v418, %v802
        %v931 = vmul.f32 %v419, %v803
        %v932 = vmul.f32 %v420, %v804
        %v933 = vmul.f32 %v421, %v805
        %v934 = vmul.f32 %v422, %v806
        %v935 = vmul.f32 %v423, %v807
        %v936 = vmul.f32 %v424, %v808
        %v937 = vmul.f32 %v425, %v809
        %v938 = vmul.f32 %v426, %v810
        %v939 = vmul.f32 %v427, %v811
        %v940 = vmul.f32 %v428, %v812
        %v941 = vmul.f32 %v429, %v813
        %v942 = vmul.f32 %v430, %v814
        %v943 = vmul.f32 %v431, %v815
        %v944 = vmul.f32 %v432, %v816
        %v945 = vmul.f32 %v433, %v817
        %v946 = vmul.f32 %v434, %v818
        %v947 = vmul.f32 %v435, %v819
        %v948 = vmul.f32 %v436, %v820
        %v949 = vmul.f32 %v437, %v821
        %v950 = vmul.f32 %v438, %v822
        %v951 = vmul.f32 %v439, %v823
        %v952 = vmul.f32 %v440, %v824
        %v953 = vmul.f32 %v441, %v825
        %v954 = vmul.f32 %v442, %v826
        %v955 = vmul.f32 %v443, %v827
        %v956 = vmul.f32 %v444, %v828
        %v957 = vmul.f32 %v445, %v829
        %v958 = vmul.f32 %v446, %v830
        %v959 = vmul.f32 %v447, %v831
        %v960 = vmul.f32 %v448, %v832
        %v961 = vmul.f32 %v449, %v833
        %v962 = vmul.f32 %v450, %v834
        %v963 = vmul.f32 %v451, %v835
        %v964 = vmul.f32 %v452, %v836
        %v965 = vmul.f32 %v453, %v837
        %v966 = vmul.f32 %v454, %v838
        %v967 = vmul.f32 %v455, %v839
        %v968 = vmul.f32 %v456, %v840
        %v969 = vmul.f32 %v457, %v841
        %v970 = vmul.f32 %v458, %v842
        %v971 = vmul.f32 %v459, %v843
        %v972 = vmul.f32 %v460, %v844
        %v973 = vmul.f32 %v461, %v845
        %v974 = vmul.f32 %v462, %v846
        %v975 = vmul.f32 %v463, %v847
        %v976 = vmul.f32 %v464, %v848
        %v977 = vmul.f32 %v465, %v849
        %v978 = vmul.f32 %v466, %v850
        %v979 = vmul.f32 %v467, %v851
        %v980 = vmul.f32 %v468, %v852
        %v981 = vmul.f32 %v469, %v853
        %v982 = vmul.f32 %v470, %v854
        %v983 = vmul.f32 %v471, %v855
        %v984 = vmul.f32 %v472, %v856
        %v985 = vmul.f32 %v473, %v857
        %v986 = vmul.f32 %v474, %v858
        %v987 = vmul.f32 %v475, %v859
        %v988 = vmul.f32 %v476, %v860
        %v989 = vmul.f32 %v477, %v861
        %v990 = vmul.f32 %v478, %v862
        %v991 = vmul.f32 %v479, %v863
        %v992 = vmul.f32 %v480, %v864
        %v993 = vmul.f32 %v481, %v865
        %v994 = vmul.f32 %v482, %v866
        %v995 = vmul.f32 %v483, %v867
        %v996 = vmul.f32 %v484, %v868
        %v997 = vmul.f32 %v485, %v869
        %v998 = vmul.f32 %v486, %v870
        %v999 = vmul.f32 %v487, %v871
        %v1000 = vmul.f32 %v488, %v872
        %v1001 = vmul.f32 %v489, %v873
        %v1002 = vmul.f32 %v490, %v874
        %v1003 = vmul.f32 %v491, %v875
        %v1004 = vmul.f32 %v492, %v876
        %v1005 = vmul.f32 %v493, %v877
        %v1006 = vmul.f32 %v494, %v878
        %v1007 = vmul.f32 %v495, %v879
        %v1008 = vmul.f32 %v496, %v880
        %v1009 = vmul.f32 %v497, %v881
        %v1010 = vmul.f32 %v498, %v882
        %v1011 = vmul.f32 %v499, %v883
        %v1012 = vmul.f32 %v500, %v884
        %v1013 = vmul.f32 %v501, %v885
        %v1014 = vmul.f32 %v502, %v886
        %v1015 = vmul.f32 %v503, %v887
        %v1016 = vmul.f32 %v504, %v888
        %v1017 = vmul.f32 %v505, %v889
        %v1018 = vmul.f32 %v506, %v890
        %v1019 = vmul.f32 %v507, %v891
        %v1020 = vmul.f32 %v508, %v892
        %v1021 = vld [vmem:[#allocation5] sm:$0xff]
        %v1022 = vld [vmem:[#allocation5 + $0x8] sm:$0xff]
        %v1023 = vld [vmem:[#allocation5 + $0x10] sm:$0xff]
        %v1024 = vld [vmem:[#allocation5 + $0x18] sm:$0xff]
        %v1025 = vld [vmem:[#allocation5 + $0x20] sm:$0xff]
        %v1026 = vld [vmem:[#allocation5 + $0x28] sm:$0xff]
        %v1027 = vld [vmem:[#allocation5 + $0x30] sm:$0xff]
        %v1028 = vld [vmem:[#allocation5 + $0x38] sm:$0xff]
        %v1029 = vld [vmem:[#allocation5 + $0x40] sm:$0xff]
        %v1030 = vld [vmem:[#allocation5 + $0x48] sm:$0xff]
        %v1031 = vld [vmem:[#allocation5 + $0x50] sm:$0xff]
        %v1032 = vld [vmem:[#allocation5 + $0x58] sm:$0xff]
        %v1033 = vld [vmem:[#allocation5 + $0x60] sm:$0xff]
        %v1034 = vld [vmem:[#allocation5 + $0x68] sm:$0xff]
        %v1035 = vld [vmem:[#allocation5 + $0x70] sm:$0xff]
        %v1036 = vld [vmem:[#allocation5 + $0x78] sm:$0xff]
        %v1037 = vld [vmem:[#allocation5 + $0x80] sm:$0xff]
        %v1038 = vld [vmem:[#allocation5 + $0x88] sm:$0xff]
        %v1039 = vld [vmem:[#allocation5 + $0x90] sm:$0xff]
        %v1040 = vld [vmem:[#allocation5 + $0x98] sm:$0xff]
        %v1041 = vld [vmem:[#allocation5 + $0xa0] sm:$0xff]
        %v1042 = vld [vmem:[#allocation5 + $0xa8] sm:$0xff]
        %v1043 = vld [vmem:[#allocation5 + $0xb0] sm:$0xff]
        %v1044 = vld [vmem:[#allocation5 + $0xb8] sm:$0xff]
        %v1045 = vld [vmem:[#allocation5 + $0xc0] sm:$0xff]
        %v1046 = vld [vmem:[#allocation5 + $0xc8] sm:$0xff]
        %v1047 = vld [vmem:[#allocation5 + $0xd0] sm:$0xff]
        %v1048 = vld [vmem:[#allocation5 + $0xd8] sm:$0xff]
        %v1049 = vld [vmem:[#allocation5 + $0xe0] sm:$0xff]
        %v1050 = vld [vmem:[#allocation5 + $0xe8] sm:$0xff]
        %v1051 = vld [vmem:[#allocation5 + $0xf0] sm:$0xff]
        %v1052 = vld [vmem:[#allocation5 + $0xf8] sm:$0xff]
        %v1053 = vld [vmem:[#allocation5 + $0x100] sm:$0xff]
        %v1054 = vld [vmem:[#allocation5 + $0x108] sm:$0xff]
        %v1055 = vld [vmem:[#allocation5 + $0x110] sm:$0xff]
        %v1056 = vld [vmem:[#allocation5 + $0x118] sm:$0xff]
        %v1057 = vld [vmem:[#allocation5 + $0x120] sm:$0xff]
        %v1058 = vld [vmem:[#allocation5 + $0x128] sm:$0xff]
        %v1059 = vld [vmem:[#allocation5 + $0x130] sm:$0xff]
        %v1060 = vld [vmem:[#allocation5 + $0x138] sm:$0xff]
        %v1061 = vld [vmem:[#allocation5 + $0x140] sm:$0xff]
        %v1062 = vld [vmem:[#allocation5 + $0x148] sm:$0xff]
        %v1063 = vld [vmem:[#allocation5 + $0x150] sm:$0xff]
        %v1064 = vld [vmem:[#allocation5 + $0x158] sm:$0xff]
        %v1065 = vld [vmem:[#allocation5 + $0x160] sm:$0xff]
        %v1066 = vld [vmem:[#allocation5 + $0x168] sm:$0xff]
        %v1067 = vld [vmem:[#allocation5 + $0x170] sm:$0xff]
        %v1068 = vld [vmem:[#allocation5 + $0x178] sm:$0xff]
        %v1069 = vld [vmem:[#allocation5 + $0x180] sm:$0xff]
        %v1070 = vld [vmem:[#allocation5 + $0x188] sm:$0xff]
        %v1071 = vld [vmem:[#allocation5 + $0x190] sm:$0xff]
        %v1072 = vld [vmem:[#allocation5 + $0x198] sm:$0xff]
        %v1073 = vld [vmem:[#allocation5 + $0x1a0] sm:$0xff]
        %v1074 = vld [vmem:[#allocation5 + $0x1a8] sm:$0xff]
        %v1075 = vld [vmem:[#allocation5 + $0x1b0] sm:$0xff]
        %v1076 = vld [vmem:[#allocation5 + $0x1b8] sm:$0xff]
        %v1077 = vld [vmem:[#allocation5 + $0x1c0] sm:$0xff]
        %v1078 = vld [vmem:[#allocation5 + $0x1c8] sm:$0xff]
        %v1079 = vld [vmem:[#allocation5 + $0x1d0] sm:$0xff]
        %v1080 = vld [vmem:[#allocation5 + $0x1d8] sm:$0xff]
        %v1081 = vld [vmem:[#allocation5 + $0x1e0] sm:$0xff]
        %v1082 = vld [vmem:[#allocation5 + $0x1e8] sm:$0xff]
        %v1083 = vld [vmem:[#allocation5 + $0x1f0] sm:$0xff]
        %v1084 = vld [vmem:[#allocation5 + $0x1f8] sm:$0xff]
        %v1085 = vld [vmem:[#allocation5 + $0x200] sm:$0xff]
        %v1086 = vld [vmem:[#allocation5 + $0x208] sm:$0xff]
        %v1087 = vld [vmem:[#allocation5 + $0x210] sm:$0xff]
        %v1088 = vld [vmem:[#allocation5 + $0x218] sm:$0xff]
        %v1089 = vld [vmem:[#allocation5 + $0x220] sm:$0xff]
        %v1090 = vld [vmem:[#allocation5 + $0x228] sm:$0xff]
        %v1091 = vld [vmem:[#allocation5 + $0x230] sm:$0xff]
        %v1092 = vld [vmem:[#allocation5 + $0x238] sm:$0xff]
        %v1093 = vld [vmem:[#allocation5 + $0x240] sm:$0xff]
        %v1094 = vld [vmem:[#allocation5 + $0x248] sm:$0xff]
        %v1095 = vld [vmem:[#allocation5 + $0x250] sm:$0xff]
        %v1096 = vld [vmem:[#allocation5 + $0x258] sm:$0xff]
        %v1097 = vld [vmem:[#allocation5 + $0x260] sm:$0xff]
        %v1098 = vld [vmem:[#allocation5 + $0x268] sm:$0xff]
        %v1099 = vld [vmem:[#allocation5 + $0x270] sm:$0xff]
        %v1100 = vld [vmem:[#allocation5 + $0x278] sm:$0xff]
        %v1101 = vld [vmem:[#allocation5 + $0x280] sm:$0xff]
        %v1102 = vld [vmem:[#allocation5 + $0x288] sm:$0xff]
        %v1103 = vld [vmem:[#allocation5 + $0x290] sm:$0xff]
        %v1104 = vld [vmem:[#allocation5 + $0x298] sm:$0xff]
        %v1105 = vld [vmem:[#allocation5 + $0x2a0] sm:$0xff]
        %v1106 = vld [vmem:[#allocation5 + $0x2a8] sm:$0xff]
        %v1107 = vld [vmem:[#allocation5 + $0x2b0] sm:$0xff]
        %v1108 = vld [vmem:[#allocation5 + $0x2b8] sm:$0xff]
        %v1109 = vld [vmem:[#allocation5 + $0x2c0] sm:$0xff]
        %v1110 = vld [vmem:[#allocation5 + $0x2c8] sm:$0xff]
        %v1111 = vld [vmem:[#allocation5 + $0x2d0] sm:$0xff]
        %v1112 = vld [vmem:[#allocation5 + $0x2d8] sm:$0xff]
        %v1113 = vld [vmem:[#allocation5 + $0x2e0] sm:$0xff]
        %v1114 = vld [vmem:[#allocation5 + $0x2e8] sm:$0xff]
        %v1115 = vld [vmem:[#allocation5 + $0x2f0] sm:$0xff]
        %v1116 = vld [vmem:[#allocation5 + $0x2f8] sm:$0xff]
        %v1117 = vld [vmem:[#allocation5 + $0x300] sm:$0xff]
        %v1118 = vld [vmem:[#allocation5 + $0x308] sm:$0xff]
        %v1119 = vld [vmem:[#allocation5 + $0x310] sm:$0xff]
        %v1120 = vld [vmem:[#allocation5 + $0x318] sm:$0xff]
        %v1121 = vld [vmem:[#allocation5 + $0x320] sm:$0xff]
        %v1122 = vld [vmem:[#allocation5 + $0x328] sm:$0xff]
        %v1123 = vld [vmem:[#allocation5 + $0x330] sm:$0xff]
        %v1124 = vld [vmem:[#allocation5 + $0x338] sm:$0xff]
        %v1125 = vld [vmem:[#allocation5 + $0x340] sm:$0xff]
        %v1126 = vld [vmem:[#allocation5 + $0x348] sm:$0xff]
        %v1127 = vld [vmem:[#allocation5 + $0x350] sm:$0xff]
        %v1128 = vld [vmem:[#allocation5 + $0x358] sm:$0xff]
        %v1129 = vld [vmem:[#allocation5 + $0x360] sm:$0xff]
        %v1130 = vld [vmem:[#allocation5 + $0x368] sm:$0xff]
        %v1131 = vld [vmem:[#allocation5 + $0x370] sm:$0xff]
        %v1132 = vld [vmem:[#allocation5 + $0x378] sm:$0xff]
        %v1133 = vld [vmem:[#allocation5 + $0x380] sm:$0xff]
        %v1134 = vld [vmem:[#allocation5 + $0x388] sm:$0xff]
        %v1135 = vld [vmem:[#allocation5 + $0x390] sm:$0xff]
        %v1136 = vld [vmem:[#allocation5 + $0x398] sm:$0xff]
        %v1137 = vld [vmem:[#allocation5 + $0x3a0] sm:$0xff]
        %v1138 = vld [vmem:[#allocation5 + $0x3a8] sm:$0xff]
        %v1139 = vld [vmem:[#allocation5 + $0x3b0] sm:$0xff]
        %v1140 = vld [vmem:[#allocation5 + $0x3b8] sm:$0xff]
        %v1141 = vld [vmem:[#allocation5 + $0x3c0] sm:$0xff]
        %v1142 = vld [vmem:[#allocation5 + $0x3c8] sm:$0xff]
        %v1143 = vld [vmem:[#allocation5 + $0x3d0] sm:$0xff]
        %v1144 = vld [vmem:[#allocation5 + $0x3d8] sm:$0xff]
        %v1145 = vld [vmem:[#allocation5 + $0x3e0] sm:$0xff]
        %v1146 = vld [vmem:[#allocation5 + $0x3e8] sm:$0xff]
        %v1147 = vld [vmem:[#allocation5 + $0x3f0] sm:$0xff]
        %v1148 = vld [vmem:[#allocation5 + $0x3f8] sm:$0xff]
        %v1149 = vld [vmem:[#allocation5 + $0x400] sm:$0xff]
        %v1150 = vld [vmem:[#allocation5 + $0x408] sm:$0xff]
        %v1151 = vld [vmem:[#allocation5 + $0x410] sm:$0xff]
        %v1152 = vld [vmem:[#allocation5 + $0x418] sm:$0xff]
        %v1153 = vld [vmem:[#allocation5 + $0x420] sm:$0xff]
        %v1154 = vld [vmem:[#allocation5 + $0x428] sm:$0xff]
        %v1155 = vld [vmem:[#allocation5 + $0x430] sm:$0xff]
        %v1156 = vld [vmem:[#allocation5 + $0x438] sm:$0xff]
        %v1157 = vld [vmem:[#allocation5 + $0x440] sm:$0xff]
        %v1158 = vld [vmem:[#allocation5 + $0x448] sm:$0xff]
        %v1159 = vld [vmem:[#allocation5 + $0x450] sm:$0xff]
        %v1160 = vld [vmem:[#allocation5 + $0x458] sm:$0xff]
        %v1161 = vld [vmem:[#allocation5 + $0x460] sm:$0xff]
        %v1162 = vld [vmem:[#allocation5 + $0x468] sm:$0xff]
        %v1163 = vld [vmem:[#allocation5 + $0x470] sm:$0xff]
        %v1164 = vld [vmem:[#allocation5 + $0x478] sm:$0xff]
        %v1165 = vld [vmem:[#allocation5 + $0x480] sm:$0xff]
        %v1166 = vld [vmem:[#allocation5 + $0x488] sm:$0xff]
        %v1167 = vld [vmem:[#allocation5 + $0x490] sm:$0xff]
        %v1168 = vld [vmem:[#allocation5 + $0x498] sm:$0xff]
        %v1169 = vld [vmem:[#allocation5 + $0x4a0] sm:$0xff]
        %v1170 = vld [vmem:[#allocation5 + $0x4a8] sm:$0xff]
        %v1171 = vld [vmem:[#allocation5 + $0x4b0] sm:$0xff]
        %v1172 = vld [vmem:[#allocation5 + $0x4b8] sm:$0xff]
        %v1173 = vld [vmem:[#allocation5 + $0x4c0] sm:$0xff]
        %v1174 = vld [vmem:[#allocation5 + $0x4c8] sm:$0xff]
        %v1175 = vld [vmem:[#allocation5 + $0x4d0] sm:$0xff]
        %v1176 = vld [vmem:[#allocation5 + $0x4d8] sm:$0xff]
        %v1177 = vld [vmem:[#allocation5 + $0x4e0] sm:$0xff]
        %v1178 = vld [vmem:[#allocation5 + $0x4e8] sm:$0xff]
        %v1179 = vld [vmem:[#allocation5 + $0x4f0] sm:$0xff]
        %v1180 = vld [vmem:[#allocation5 + $0x4f8] sm:$0xff]
        %v1181 = vld [vmem:[#allocation5 + $0x500] sm:$0xff]
        %v1182 = vld [vmem:[#allocation5 + $0x508] sm:$0xff]
        %v1183 = vld [vmem:[#allocation5 + $0x510] sm:$0xff]
        %v1184 = vld [vmem:[#allocation5 + $0x518] sm:$0xff]
        %v1185 = vld [vmem:[#allocation5 + $0x520] sm:$0xff]
        %v1186 = vld [vmem:[#allocation5 + $0x528] sm:$0xff]
        %v1187 = vld [vmem:[#allocation5 + $0x530] sm:$0xff]
        %v1188 = vld [vmem:[#allocation5 + $0x538] sm:$0xff]
        %v1189 = vld [vmem:[#allocation5 + $0x540] sm:$0xff]
        %v1190 = vld [vmem:[#allocation5 + $0x548] sm:$0xff]
        %v1191 = vld [vmem:[#allocation5 + $0x550] sm:$0xff]
        %v1192 = vld [vmem:[#allocation5 + $0x558] sm:$0xff]
        %v1193 = vld [vmem:[#allocation5 + $0x560] sm:$0xff]
        %v1194 = vld [vmem:[#allocation5 + $0x568] sm:$0xff]
        %v1195 = vld [vmem:[#allocation5 + $0x570] sm:$0xff]
        %v1196 = vld [vmem:[#allocation5 + $0x578] sm:$0xff]
        %v1197 = vld [vmem:[#allocation5 + $0x580] sm:$0xff]
        %v1198 = vld [vmem:[#allocation5 + $0x588] sm:$0xff]
        %v1199 = vld [vmem:[#allocation5 + $0x590] sm:$0xff]
        %v1200 = vld [vmem:[#allocation5 + $0x598] sm:$0xff]
        %v1201 = vld [vmem:[#allocation5 + $0x5a0] sm:$0xff]
        %v1202 = vld [vmem:[#allocation5 + $0x5a8] sm:$0xff]
        %v1203 = vld [vmem:[#allocation5 + $0x5b0] sm:$0xff]
        %v1204 = vld [vmem:[#allocation5 + $0x5b8] sm:$0xff]
        %v1205 = vld [vmem:[#allocation5 + $0x5c0] sm:$0xff]
        %v1206 = vld [vmem:[#allocation5 + $0x5c8] sm:$0xff]
        %v1207 = vld [vmem:[#allocation5 + $0x5d0] sm:$0xff]
        %v1208 = vld [vmem:[#allocation5 + $0x5d8] sm:$0xff]
        %v1209 = vld [vmem:[#allocation5 + $0x5e0] sm:$0xff]
        %v1210 = vld [vmem:[#allocation5 + $0x5e8] sm:$0xff]
        %v1211 = vld [vmem:[#allocation5 + $0x5f0] sm:$0xff]
        %v1212 = vld [vmem:[#allocation5 + $0x5f8] sm:$0xff]
        %v1213 = vld [vmem:[#allocation5 + $0x600] sm:$0xff]
        %v1214 = vld [vmem:[#allocation5 + $0x608] sm:$0xff]
        %v1215 = vld [vmem:[#allocation5 + $0x610] sm:$0xff]
        %v1216 = vld [vmem:[#allocation5 + $0x618] sm:$0xff]
        %v1217 = vld [vmem:[#allocation5 + $0x620] sm:$0xff]
        %v1218 = vld [vmem:[#allocation5 + $0x628] sm:$0xff]
        %v1219 = vld [vmem:[#allocation5 + $0x630] sm:$0xff]
        %v1220 = vld [vmem:[#allocation5 + $0x638] sm:$0xff]
        %v1221 = vld [vmem:[#allocation5 + $0x640] sm:$0xff]
        %v1222 = vld [vmem:[#allocation5 + $0x648] sm:$0xff]
        %v1223 = vld [vmem:[#allocation5 + $0x650] sm:$0xff]
        %v1224 = vld [vmem:[#allocation5 + $0x658] sm:$0xff]
        %v1225 = vld [vmem:[#allocation5 + $0x660] sm:$0xff]
        %v1226 = vld [vmem:[#allocation5 + $0x668] sm:$0xff]
        %v1227 = vld [vmem:[#allocation5 + $0x670] sm:$0xff]
        %v1228 = vld [vmem:[#allocation5 + $0x678] sm:$0xff]
        %v1229 = vld [vmem:[#allocation5 + $0x680] sm:$0xff]
        %v1230 = vld [vmem:[#allocation5 + $0x688] sm:$0xff]
        %v1231 = vld [vmem:[#allocation5 + $0x690] sm:$0xff]
        %v1232 = vld [vmem:[#allocation5 + $0x698] sm:$0xff]
        %v1233 = vld [vmem:[#allocation5 + $0x6a0] sm:$0xff]
        %v1234 = vld [vmem:[#allocation5 + $0x6a8] sm:$0xff]
        %v1235 = vld [vmem:[#allocation5 + $0x6b0] sm:$0xff]
        %v1236 = vld [vmem:[#allocation5 + $0x6b8] sm:$0xff]
        %v1237 = vld [vmem:[#allocation5 + $0x6c0] sm:$0xff]
        %v1238 = vld [vmem:[#allocation5 + $0x6c8] sm:$0xff]
        %v1239 = vld [vmem:[#allocation5 + $0x6d0] sm:$0xff]
        %v1240 = vld [vmem:[#allocation5 + $0x6d8] sm:$0xff]
        %v1241 = vld [vmem:[#allocation5 + $0x6e0] sm:$0xff]
        %v1242 = vld [vmem:[#allocation5 + $0x6e8] sm:$0xff]
        %v1243 = vld [vmem:[#allocation5 + $0x6f0] sm:$0xff]
        %v1244 = vld [vmem:[#allocation5 + $0x6f8] sm:$0xff]
        %v1245 = vld [vmem:[#allocation5 + $0x700] sm:$0xff]
        %v1246 = vld [vmem:[#allocation5 + $0x708] sm:$0xff]
        %v1247 = vld [vmem:[#allocation5 + $0x710] sm:$0xff]
        %v1248 = vld [vmem:[#allocation5 + $0x718] sm:$0xff]
        %v1249 = vld [vmem:[#allocation5 + $0x720] sm:$0xff]
        %v1250 = vld [vmem:[#allocation5 + $0x728] sm:$0xff]
        %v1251 = vld [vmem:[#allocation5 + $0x730] sm:$0xff]
        %v1252 = vld [vmem:[#allocation5 + $0x738] sm:$0xff]
        %v1253 = vld [vmem:[#allocation5 + $0x740] sm:$0xff]
        %v1254 = vld [vmem:[#allocation5 + $0x748] sm:$0xff]
        %v1255 = vld [vmem:[#allocation5 + $0x750] sm:$0xff]
        %v1256 = vld [vmem:[#allocation5 + $0x758] sm:$0xff]
        %v1257 = vld [vmem:[#allocation5 + $0x760] sm:$0xff]
        %v1258 = vld [vmem:[#allocation5 + $0x768] sm:$0xff]
        %v1259 = vld [vmem:[#allocation5 + $0x770] sm:$0xff]
        %v1260 = vld [vmem:[#allocation5 + $0x778] sm:$0xff]
        %v1261 = vld [vmem:[#allocation5 + $0x780] sm:$0xff]
        %v1262 = vld [vmem:[#allocation5 + $0x788] sm:$0xff]
        %v1263 = vld [vmem:[#allocation5 + $0x790] sm:$0xff]
        %v1264 = vld [vmem:[#allocation5 + $0x798] sm:$0xff]
        %v1265 = vld [vmem:[#allocation5 + $0x7a0] sm:$0xff]
        %v1266 = vld [vmem:[#allocation5 + $0x7a8] sm:$0xff]
        %v1267 = vld [vmem:[#allocation5 + $0x7b0] sm:$0xff]
        %v1268 = vld [vmem:[#allocation5 + $0x7b8] sm:$0xff]
        %v1269 = vld [vmem:[#allocation5 + $0x7c0] sm:$0xff]
        %v1270 = vld [vmem:[#allocation5 + $0x7c8] sm:$0xff]
        %v1271 = vld [vmem:[#allocation5 + $0x7d0] sm:$0xff]
        %v1272 = vld [vmem:[#allocation5 + $0x7d8] sm:$0xff]
        %v1273 = vld [vmem:[#allocation5 + $0x7e0] sm:$0xff]
        %v1274 = vld [vmem:[#allocation5 + $0x7e8] sm:$0xff]
        %v1275 = vld [vmem:[#allocation5 + $0x7f0] sm:$0xff]
        %v1276 = vld [vmem:[#allocation5 + $0x7f8] sm:$0xff]
        %v1277 = vld [vmem:[#allocation7] sm:$0x3]
        %v1279 = vlaneseq
        %v1280 = vshrl.u32 %v1279, 7
        %v1281 = vsub.s32 0, %v1280
        %v1282 = vrot.slane %v1277, %v1281
        %v1283 = vlaneseq
        %v1284 = vshrl.u32 %v1283, 7
        %v1285 = vsub.s32 1, %v1284
        %v1286 = vrot.slane %v1277, %v1285
        %1289 = vmatprep.subr.mxu0 %v1022
        %1290 = vmatpush1.xpose.msra.mxu0 %v1021
        %1291 = vmatprep.subr.mxu0 %v1030
        %1292 = vmatpush1.xpose.msra.mxu0 %v1029
        %1293 = vmatprep.subr.mxu0 %v1038
        %1294 = vmatpush1.xpose.msra.mxu0 %v1037
        %1295 = vmatprep.subr.mxu0 %v1046
        %1296 = vmatpush1.xpose.msra.mxu0 %v1045
        %1297 = vmatprep.subr.mxu0 %v1054
        %1298 = vmatpush1.xpose.msra.mxu0 %v1053
        %1299 = vmatprep.subr.mxu0 %v1062
        %1300 = vmatpush1.xpose.msra.mxu0 %v1061
        %1301 = vmatprep.subr.mxu0 %v1070
        %1302 = vmatpush1.xpose.msra.mxu0 %v1069
        %1303 = vmatprep.subr.mxu0 %v1078
        %1304 = vmatpush1.xpose.msra.mxu0 %v1077
        %1305 = vmatprep.subr.mxu0 %v1086
        %1306 = vmatpush1.xpose.msra.mxu0 %v1085
        %1307 = vmatprep.subr.mxu0 %v1094
        %1308 = vmatpush1.xpose.msra.mxu0 %v1093
        %1309 = vmatprep.subr.mxu0 %v1102
        %1310 = vmatpush1.xpose.msra.mxu0 %v1101
        %1311 = vmatprep.subr.mxu0 %v1110
        %1312 = vmatpush1.xpose.msra.mxu0 %v1109
        %1313 = vmatprep.subr.mxu0 %v1118
        %1314 = vmatpush1.xpose.msra.mxu0 %v1117
        %1315 = vmatprep.subr.mxu0 %v1126
        %1316 = vmatpush1.xpose.msra.mxu0 %v1125
        %1317 = vmatprep.subr.mxu0 %v1134
        %1318 = vmatpush1.xpose.msra.mxu0 %v1133
        %1319 = vmatprep.subr.mxu0 %v1142
        %1320 = vmatpush1.xpose.msra.mxu0 %v1141
        %1321 = vmatprep.subr.mxu0 %v1150
        %1322 = vmatpush1.xpose.msra.mxu0 %v1149
        %1323 = vmatprep.subr.mxu0 %v1158
        %1324 = vmatpush1.xpose.msra.mxu0 %v1157
        %1325 = vmatprep.subr.mxu0 %v1166
        %1326 = vmatpush1.xpose.msra.mxu0 %v1165
        %1327 = vmatprep.subr.mxu0 %v1174
        %1328 = vmatpush1.xpose.msra.mxu0 %v1173
        %1329 = vmatprep.subr.mxu0 %v1182
        %1330 = vmatpush1.xpose.msra.mxu0 %v1181
        %1331 = vmatprep.subr.mxu0 %v1190
        %1332 = vmatpush1.xpose.msra.mxu0 %v1189
        %1333 = vmatprep.subr.mxu0 %v1198
        %1334 = vmatpush1.xpose.msra.mxu0 %v1197
        %1335 = vmatprep.subr.mxu0 %v1206
        %1336 = vmatpush1.xpose.msra.mxu0 %v1205
        %1337 = vmatprep.subr.mxu0 %v1214
        %1338 = vmatpush1.xpose.msra.mxu0 %v1213
        %1339 = vmatprep.subr.mxu0 %v1222
        %1340 = vmatpush1.xpose.msra.mxu0 %v1221
        %1341 = vmatprep.subr.mxu0 %v1230
        %1342 = vmatpush1.xpose.msra.mxu0 %v1229
        %1343 = vmatprep.subr.mxu0 %v1238
        %1344 = vmatpush1.xpose.msra.mxu0 %v1237
        %1345 = vmatprep.subr.mxu0 %v1246
        %1346 = vmatpush1.xpose.msra.mxu0 %v1245
        %1347 = vmatprep.subr.mxu0 %v1254
        %1348 = vmatpush1.xpose.msra.mxu0 %v1253
        %1349 = vmatprep.subr.mxu0 %v1262
        %1350 = vmatpush1.xpose.msra.mxu0 %v1261
        %1351 = vmatprep.subr.mxu0 %v1270
        %1352 = vmatpush1.xpose.msra.mxu0 %v1269
        %1353 = vmatprep.mubr.f32.mxu0 %v894
        %1354 = vmatmul.mubr.f32.gmra.mrb[0].mxu0 %v893
        %v1355 = vpop.f32.mrb[0].mxu0
        %v1356 = vadd.f32 %v1282, %v1355
        %v1357 = vpop.f32.mrb[0].mxu0
        %v1358 = vadd.f32 %v1286, %v1357
        %1359 = vmatprep.mubr.f32.mxu0 %v902
        %1360 = vmatmul.mubr.f32.gmra.mrb[0].mxu0 %v901
        %v1361 = vpop.f32.mrb[0].mxu0
        %v1362 = vadd.f32 %v1282, %v1361
        %v1363 = vpop.f32.mrb[0].mxu0
        %v1364 = vadd.f32 %v1286, %v1363
        %1365 = vmatprep.mubr.f32.mxu0 %v910
        %1366 = vmatmul.mubr.f32.gmra.mrb[0].mxu0 %v909
        %v1367 = vpop.f32.mrb[0].mxu0
        %v1368 = vadd.f32 %v1282, %v1367
        %v1369 = vpop.f32.mrb[0].mxu0
        %v1370 = vadd.f32 %v1286, %v1369
        %1371 = vmatprep.mubr.f32.mxu0 %v918
        %1372 = vmatmul.mubr.f32.gmra.mrb[0].mxu0 %v917
        %v1373 = vpop.f32.mrb[0].mxu0
        %v1374 = vadd.f32 %v1282, %v1373
        %v1375 = vpop.f32.mrb[0].mxu0
        %v1376 = vadd.f32 %v1286, %v1375
        %1377 = vmatprep.mubr.f32.mxu0 %v926
        %1378 = vmatmul.mubr.f32.gmra.mrb[0].mxu0 %v925
        %v1379 = vpop.f32.mrb[0].mxu0
        %v1380 = vadd.f32 %v1282, %v1379
        %v1381 = vpop.f32.mrb[0].mxu0
        %v1382 = vadd.f32 %v1286, %v1381
        %1383 = vmatprep.mubr.f32.mxu0 %v934
        %1384 = vmatmul.mubr.f32.gmra.mrb[0].mxu0 %v933
        %v1385 = vpop.f32.mrb[0].mxu0
        %v1386 = vadd.f32 %v1282, %v1385
        %v1387 = vpop.f32.mrb[0].mxu0
        %v1388 = vadd.f32 %v1286, %v1387
        %1389 = vmatprep.mubr.f32.mxu0 %v942
        %1390 = vmatmul.mubr.f32.gmra.mrb[0].mxu0 %v941
        %v1391 = vpop.f32.mrb[0].mxu0
        %v1392 = vadd.f32 %v1282, %v1391
        %v1393 = vpop.f32.mrb[0].mxu0
        %v1394 = vadd.f32 %v1286, %v1393
        %1395 = vmatprep.mubr.f32.mxu0 %v950
        %1396 = vmatmul.mubr.f32.gmra.mrb[0].mxu0 %v949
        %v1397 = vpop.f32.mrb[0].mxu0
        %v1398 = vadd.f32 %v1282, %v1397
        %v1399 = vpop.f32.mrb[0].mxu0
        %v1400 = vadd.f32 %v1286, %v1399
        %1401 = vmatprep.mubr.f32.mxu0 %v958
        %1402 = vmatmul.mubr.f32.gmra.mrb[0].mxu0 %v957
        %v1403 = vpop.f32.mrb[0].mxu0
        %v1404 = vadd.f32 %v1282, %v1403
        %v1405 = vpop.f32.mrb[0].mxu0
        %v1406 = vadd.f32 %v1286, %v1405
        %1407 = vmatprep.mubr.f32.mxu0 %v966
        %1408 = vmatmul.mubr.f32.gmra.mrb[0].mxu0 %v965
        %v1409 = vpop.f32.mrb[0].mxu0
        %v1410 = vadd.f32 %v1282, %v1409
        %v1411 = vpop.f32.mrb[0].mxu0
        %v1412 = vadd.f32 %v1286, %v1411
        %1413 = vmatprep.mubr.f32.mxu0 %v974
        %1414 = vmatmul.mubr.f32.gmra.mrb[0].mxu0 %v973
        %v1415 = vpop.f32.mrb[0].mxu0
        %v1416 = vadd.f32 %v1282, %v1415
        %v1417 = vpop.f32.mrb[0].mxu0
        %v1418 = vadd.f32 %v1286, %v1417
        %1419 = vmatprep.mubr.f32.mxu0 %v982
        %1420 = vmatmul.mubr.f32.gmra.mrb[0].mxu0 %v981
        %v1421 = vpop.f32.mrb[0].mxu0
        %v1422 = vadd.f32 %v1282, %v1421
        %v1423 = vpop.f32.mrb[0].mxu0
        %v1424 = vadd.f32 %v1286, %v1423
        %1425 = vmatprep.mubr.f32.mxu0 %v990
        %1426 = vmatmul.mubr.f32.gmra.mrb[0].mxu0 %v989
        %v1427 = vpop.f32.mrb[0].mxu0
        %v1428 = vadd.f32 %v1282, %v1427
        %v1429 = vpop.f32.mrb[0].mxu0
        %v1430 = vadd.f32 %v1286, %v1429
        %1431 = vmatprep.mubr.f32.mxu0 %v998
        %1432 = vmatmul.mubr.f32.gmra.mrb[0].mxu0 %v997
        %v1433 = vpop.f32.mrb[0].mxu0
        %v1434 = vadd.f32 %v1282, %v1433
        %v1435 = vpop.f32.mrb[0].mxu0
        %v1436 = vadd.f32 %v1286, %v1435
        %1437 = vmatprep.mubr.f32.mxu0 %v1006
        %1438 = vmatmul.mubr.f32.gmra.mrb[0].mxu0 %v1005
        %v1439 = vpop.f32.mrb[0].mxu0
        %v1440 = vadd.f32 %v1282, %v1439
        %v1441 = vpop.f32.mrb[0].mxu0
        %v1442 = vadd.f32 %v1286, %v1441
        %1443 = vmatprep.mubr.f32.mxu0 %v1014
        %1444 = vmatmul.mubr.f32.gmra.mrb[0].mxu0 %v1013
        %v1445 = vpop.f32.mrb[0].mxu0
        %v1446 = vadd.f32 %v1282, %v1445
        %v1447 = vpop.f32.mrb[0].mxu0
        %v1448 = vadd.f32 %v1286, %v1447
        %1449 = vdwg.mxu0
        %1450 = vmatprep.subr.mxu0 %v1024
        %1451 = vmatpush1.xpose.msra.mxu0 %v1023
        %1452 = vmatprep.subr.mxu0 %v1032
        %1453 = vmatpush1.xpose.msra.mxu0 %v1031
        %1454 = vmatprep.subr.mxu0 %v1040
        %1455 = vmatpush1.xpose.msra.mxu0 %v1039
        %1456 = vmatprep.subr.mxu0 %v1048
        %1457 = vmatpush1.xpose.msra.mxu0 %v1047
        %1458 = vmatprep.subr.mxu0 %v1056
        %1459 = vmatpush1.xpose.msra.mxu0 %v1055
        %1460 = vmatprep.subr.mxu0 %v1064
        %1461 = vmatpush1.xpose.msra.mxu0 %v1063
        %1462 = vmatprep.subr.mxu0 %v1072
        %1463 = vmatpush1.xpose.msra.mxu0 %v1071
        %1464 = vmatprep.subr.mxu0 %v1080
        %1465 = vmatpush1.xpose.msra.mxu0 %v1079
        %1466 = vmatprep.subr.mxu0 %v1088
        %1467 = vmatpush1.xpose.msra.mxu0 %v1087
        %1468 = vmatprep.subr.mxu0 %v1096
        %1469 = vmatpush1.xpose.msra.mxu0 %v1095
        %1470 = vmatprep.subr.mxu0 %v1104
        %1471 = vmatpush1.xpose.msra.mxu0 %v1103
        %1472 = vmatprep.subr.mxu0 %v1112
        %1473 = vmatpush1.xpose.msra.mxu0 %v1111
        %1474 = vmatprep.subr.mxu0 %v1120
        %1475 = vmatpush1.xpose.msra.mxu0 %v1119
        %1476 = vmatprep.subr.mxu0 %v1128
        %1477 = vmatpush1.xpose.msra.mxu0 %v1127
        %1478 = vmatprep.subr.mxu0 %v1136
        %1479 = vmatpush1.xpose.msra.mxu0 %v1135
        %1480 = vmatprep.subr.mxu0 %v1144
        %1481 = vmatpush1.xpose.msra.mxu0 %v1143
        %1482 = vmatprep.subr.mxu0 %v1152
        %1483 = vmatpush1.xpose.msra.mxu0 %v1151
        %1484 = vmatprep.subr.mxu0 %v1160
        %1485 = vmatpush1.xpose.msra.mxu0 %v1159
        %1486 = vmatprep.subr.mxu0 %v1168
        %1487 = vmatpush1.xpose.msra.mxu0 %v1167
        %1488 = vmatprep.subr.mxu0 %v1176
        %1489 = vmatpush1.xpose.msra.mxu0 %v1175
        %1490 = vmatprep.subr.mxu0 %v1184
        %1491 = vmatpush1.xpose.msra.mxu0 %v1183
        %1492 = vmatprep.subr.mxu0 %v1192
        %1493 = vmatpush1.xpose.msra.mxu0 %v1191
        %1494 = vmatprep.subr.mxu0 %v1200
        %1495 = vmatpush1.xpose.msra.mxu0 %v1199
        %1496 = vmatprep.subr.mxu0 %v1208
        %1497 = vmatpush1.xpose.msra.mxu0 %v1207
        %1498 = vmatprep.subr.mxu0 %v1216
        %1499 = vmatpush1.xpose.msra.mxu0 %v1215
        %1500 = vmatprep.subr.mxu0 %v1224
        %1501 = vmatpush1.xpose.msra.mxu0 %v1223
        %1502 = vmatprep.subr.mxu0 %v1232
        %1503 = vmatpush1.xpose.msra.mxu0 %v1231
        %1504 = vmatprep.subr.mxu0 %v1240
        %1505 = vmatpush1.xpose.msra.mxu0 %v1239
        %1506 = vmatprep.subr.mxu0 %v1248
        %1507 = vmatpush1.xpose.msra.mxu0 %v1247
        %1508 = vmatprep.subr.mxu0 %v1256
        %1509 = vmatpush1.xpose.msra.mxu0 %v1255
        %1510 = vmatprep.subr.mxu0 %v1264
        %1511 = vmatpush1.xpose.msra.mxu0 %v1263
        %1512 = vmatprep.subr.mxu0 %v1272
        %1513 = vmatpush1.xpose.msra.mxu0 %v1271
        %1514 = vmatprep.mubr.f32.mxu0 %v896
        %1515 = vmatmul.mubr.f32.gmra.mrb[0].mxu0 %v895
        %v1516 = vpop.f32.mrb[0].mxu0
        %v1517 = vadd.f32 %v1356, %v1516
        %v1518 = vpop.f32.mrb[0].mxu0
        %v1519 = vadd.f32 %v1358, %v1518
        %1520 = vmatprep.mubr.f32.mxu0 %v904
        %1521 = vmatmul.mubr.f32.gmra.mrb[0].mxu0 %v903
        %v1522 = vpop.f32.mrb[0].mxu0
        %v1523 = vadd.f32 %v1362, %v1522
        %v1524 = vpop.f32.mrb[0].mxu0
        %v1525 = vadd.f32 %v1364, %v1524
        %1526 = vmatprep.mubr.f32.mxu0 %v912
        %1527 = vmatmul.mubr.f32.gmra.mrb[0].mxu0 %v911
        %v1528 = vpop.f32.mrb[0].mxu0
        %v1529 = vadd.f32 %v1368, %v1528
        %v1530 = vpop.f32.mrb[0].mxu0
        %v1531 = vadd.f32 %v1370, %v1530
        %1532 = vmatprep.mubr.f32.mxu0 %v920
        %1533 = vmatmul.mubr.f32.gmra.mrb[0].mxu0 %v919
        %v1534 = vpop.f32.mrb[0].mxu0
        %v1535 = vadd.f32 %v1374, %v1534
        %v1536 = vpop.f32.mrb[0].mxu0
        %v1537 = vadd.f32 %v1376, %v1536
        %1538 = vmatprep.mubr.f32.mxu0 %v928
        %1539 = vmatmul.mubr.f32.gmra.mrb[0].mxu0 %v927
        %v1540 = vpop.f32.mrb[0].mxu0
        %v1541 = vadd.f32 %v1380, %v1540
        %v1542 = vpop.f32.mrb[0].mxu0
        %v1543 = vadd.f32 %v1382, %v1542
        %1544 = vmatprep.mubr.f32.mxu0 %v936
        %1545 = vmatmul.mubr.f32.gmra.mrb[0].mxu0 %v935
        %v1546 = vpop.f32.mrb[0].mxu0
        %v1547 = vadd.f32 %v1386, %v1546
        %v1548 = vpop.f32.mrb[0].mxu0
        %v1549 = vadd.f32 %v1388, %v1548
        %1550 = vmatprep.mubr.f32.mxu0 %v944
        %1551 = vmatmul.mubr.f32.gmra.mrb[0].mxu0 %v943
        %v1552 = vpop.f32.mrb[0].mxu0
        %v1553 = vadd.f32 %v1392, %v1552
        %v1554 = vpop.f32.mrb[0].mxu0
        %v1555 = vadd.f32 %v1394, %v1554
        %1556 = vmatprep.mubr.f32.mxu0 %v952
        %1557 = vmatmul.mubr.f32.gmra.mrb[0].mxu0 %v951
        %v1558 = vpop.f32.mrb[0].mxu0
        %v1559 = vadd.f32 %v1398, %v1558
        %v1560 = vpop.f32.mrb[0].mxu0
        %v1561 = vadd.f32 %v1400, %v1560
        %1562 = vmatprep.mubr.f32.mxu0 %v960
        %1563 = vmatmul.mubr.f32.gmra.mrb[0].mxu0 %v959
        %v1564 = vpop.f32.mrb[0].mxu0
        %v1565 = vadd.f32 %v1404, %v1564
        %v1566 = vpop.f32.mrb[0].mxu0
        %v1567 = vadd.f32 %v1406, %v1566
        %1568 = vmatprep.mubr.f32.mxu0 %v968
        %1569 = vmatmul.mubr.f32.gmra.mrb[0].mxu0 %v967
        %v1570 = vpop.f32.mrb[0].mxu0
        %v1571 = vadd.f32 %v1410, %v1570
        %v1572 = vpop.f32.mrb[0].mxu0
        %v1573 = vadd.f32 %v1412, %v1572
        %1574 = vmatprep.mubr.f32.mxu0 %v976
        %1575 = vmatmul.mubr.f32.gmra.mrb[0].mxu0 %v975
        %v1576 = vpop.f32.mrb[0].mxu0
        %v1577 = vadd.f32 %v1416, %v1576
        %v1578 = vpop.f32.mrb[0].mxu0
        %v1579 = vadd.f32 %v1418, %v1578
        %1580 = vmatprep.mubr.f32.mxu0 %v984
        %1581 = vmatmul.mubr.f32.gmra.mrb[0].mxu0 %v983
        %v1582 = vpop.f32.mrb[0].mxu0
        %v1583 = vadd.f32 %v1422, %v1582
        %v1584 = vpop.f32.mrb[0].mxu0
        %v1585 = vadd.f32 %v1424, %v1584
        %1586 = vmatprep.mubr.f32.mxu0 %v992
        %1587 = vmatmul.mubr.f32.gmra.mrb[0].mxu0 %v991
        %v1588 = vpop.f32.mrb[0].mxu0
        %v1589 = vadd.f32 %v1428, %v1588
        %v1590 = vpop.f32.mrb[0].mxu0
        %v1591 = vadd.f32 %v1430, %v1590
        %1592 = vmatprep.mubr.f32.mxu0 %v1000
        %1593 = vmatmul.mubr.f32.gmra.mrb[0].mxu0 %v999
        %v1594 = vpop.f32.mrb[0].mxu0
        %v1595 = vadd.f32 %v1434, %v1594
        %v1596 = vpop.f32.mrb[0].mxu0
        %v1597 = vadd.f32 %v1436, %v1596
        %1598 = vmatprep.mubr.f32.mxu0 %v1008
        %1599 = vmatmul.mubr.f32.gmra.mrb[0].mxu0 %v1007
        %v1600 = vpop.f32.mrb[0].mxu0
        %v1601 = vadd.f32 %v1440, %v1600
        %v1602 = vpop.f32.mrb[0].mxu0
        %v1603 = vadd.f32 %v1442, %v1602
        %1604 = vmatprep.mubr.f32.mxu0 %v1016
        %1605 = vmatmul.mubr.f32.gmra.mrb[0].mxu0 %v1015
        %v1606 = vpop.f32.mrb[0].mxu0
        %v1607 = vadd.f32 %v1446, %v1606
        %v1608 = vpop.f32.mrb[0].mxu0
        %v1609 = vadd.f32 %v1448, %v1608
        %1610 = vdwg.mxu0
        %1611 = vmatprep.subr.mxu0 %v1026
        %1612 = vmatpush1.xpose.msra.mxu0 %v1025
        %1613 = vmatprep.subr.mxu0 %v1034
        %1614 = vmatpush1.xpose.msra.mxu0 %v1033
        %1615 = vmatprep.subr.mxu0 %v1042
        %1616 = vmatpush1.xpose.msra.mxu0 %v1041
        %1617 = vmatprep.subr.mxu0 %v1050
        %1618 = vmatpush1.xpose.msra.mxu0 %v1049
        %1619 = vmatprep.subr.mxu0 %v1058
        %1620 = vmatpush1.xpose.msra.mxu0 %v1057
        %1621 = vmatprep.subr.mxu0 %v1066
        %1622 = vmatpush1.xpose.msra.mxu0 %v1065
        %1623 = vmatprep.subr.mxu0 %v1074
        %1624 = vmatpush1.xpose.msra.mxu0 %v1073
        %1625 = vmatprep.subr.mxu0 %v1082
        %1626 = vmatpush1.xpose.msra.mxu0 %v1081
        %1627 = vmatprep.subr.mxu0 %v1090
        %1628 = vmatpush1.xpose.msra.mxu0 %v1089
        %1629 = vmatprep.subr.mxu0 %v1098
        %1630 = vmatpush1.xpose.msra.mxu0 %v1097
        %1631 = vmatprep.subr.mxu0 %v1106
        %1632 = vmatpush1.xpose.msra.mxu0 %v1105
        %1633 = vmatprep.subr.mxu0 %v1114
        %1634 = vmatpush1.xpose.msra.mxu0 %v1113
        %1635 = vmatprep.subr.mxu0 %v1122
        %1636 = vmatpush1.xpose.msra.mxu0 %v1121
        %1637 = vmatprep.subr.mxu0 %v1130
        %1638 = vmatpush1.xpose.msra.mxu0 %v1129
        %1639 = vmatprep.subr.mxu0 %v1138
        %1640 = vmatpush1.xpose.msra.mxu0 %v1137
        %1641 = vmatprep.subr.mxu0 %v1146
        %1642 = vmatpush1.xpose.msra.mxu0 %v1145
        %1643 = vmatprep.subr.mxu0 %v1154
        %1644 = vmatpush1.xpose.msra.mxu0 %v1153
        %1645 = vmatprep.subr.mxu0 %v1162
        %1646 = vmatpush1.xpose.msra.mxu0 %v1161
        %1647 = vmatprep.subr.mxu0 %v1170
        %1648 = vmatpush1.xpose.msra.mxu0 %v1169
        %1649 = vmatprep.subr.mxu0 %v1178
        %1650 = vmatpush1.xpose.msra.mxu0 %v1177
        %1651 = vmatprep.subr.mxu0 %v1186
        %1652 = vmatpush1.xpose.msra.mxu0 %v1185
        %1653 = vmatprep.subr.mxu0 %v1194
        %1654 = vmatpush1.xpose.msra.mxu0 %v1193
        %1655 = vmatprep.subr.mxu0 %v1202
        %1656 = vmatpush1.xpose.msra.mxu0 %v1201
        %1657 = vmatprep.subr.mxu0 %v1210
        %1658 = vmatpush1.xpose.msra.mxu0 %v1209
        %1659 = vmatprep.subr.mxu0 %v1218
        %1660 = vmatpush1.xpose.msra.mxu0 %v1217
        %1661 = vmatprep.subr.mxu0 %v1226
        %1662 = vmatpush1.xpose.msra.mxu0 %v1225
        %1663 = vmatprep.subr.mxu0 %v1234
        %1664 = vmatpush1.xpose.msra.mxu0 %v1233
        %1665 = vmatprep.subr.mxu0 %v1242
        %1666 = vmatpush1.xpose.msra.mxu0 %v1241
        %1667 = vmatprep.subr.mxu0 %v1250
        %1668 = vmatpush1.xpose.msra.mxu0 %v1249
        %1669 = vmatprep.subr.mxu0 %v1258
        %1670 = vmatpush1.xpose.msra.mxu0 %v1257
        %1671 = vmatprep.subr.mxu0 %v1266
        %1672 = vmatpush1.xpose.msra.mxu0 %v1265
        %1673 = vmatprep.subr.mxu0 %v1274
        %1674 = vmatpush1.xpose.msra.mxu0 %v1273
        %1675 = vmatprep.mubr.f32.mxu0 %v898
        %1676 = vmatmul.mubr.f32.gmra.mrb[0].mxu0 %v897
        %v1677 = vpop.f32.mrb[0].mxu0
        %v1678 = vadd.f32 %v1517, %v1677
        %v1679 = vpop.f32.mrb[0].mxu0
        %v1680 = vadd.f32 %v1519, %v1679
        %1681 = vmatprep.mubr.f32.mxu0 %v906
        %1682 = vmatmul.mubr.f32.gmra.mrb[0].mxu0 %v905
        %v1683 = vpop.f32.mrb[0].mxu0
        %v1684 = vadd.f32 %v1523, %v1683
        %v1685 = vpop.f32.mrb[0].mxu0
        %v1686 = vadd.f32 %v1525, %v1685
        %1687 = vmatprep.mubr.f32.mxu0 %v914
        %1688 = vmatmul.mubr.f32.gmra.mrb[0].mxu0 %v913
        %v1689 = vpop.f32.mrb[0].mxu0
        %v1690 = vadd.f32 %v1529, %v1689
        %v1691 = vpop.f32.mrb[0].mxu0
        %v1692 = vadd.f32 %v1531, %v1691
        %1693 = vmatprep.mubr.f32.mxu0 %v922
        %1694 = vmatmul.mubr.f32.gmra.mrb[0].mxu0 %v921
        %v1695 = vpop.f32.mrb[0].mxu0
        %v1696 = vadd.f32 %v1535, %v1695
        %v1697 = vpop.f32.mrb[0].mxu0
        %v1698 = vadd.f32 %v1537, %v1697
        %1699 = vmatprep.mubr.f32.mxu0 %v930
        %1700 = vmatmul.mubr.f32.gmra.mrb[0].mxu0 %v929
        %v1701 = vpop.f32.mrb[0].mxu0
        %v1702 = vadd.f32 %v1541, %v1701
        %v1703 = vpop.f32.mrb[0].mxu0
        %v1704 = vadd.f32 %v1543, %v1703
        %1705 = vmatprep.mubr.f32.mxu0 %v938
        %1706 = vmatmul.mubr.f32.gmra.mrb[0].mxu0 %v937
        %v1707 = vpop.f32.mrb[0].mxu0
        %v1708 = vadd.f32 %v1547, %v1707
        %v1709 = vpop.f32.mrb[0].mxu0
        %v1710 = vadd.f32 %v1549, %v1709
        %1711 = vmatprep.mubr.f32.mxu0 %v946
        %1712 = vmatmul.mubr.f32.gmra.mrb[0].mxu0 %v945
        %v1713 = vpop.f32.mrb[0].mxu0
        %v1714 = vadd.f32 %v1553, %v1713
        %v1715 = vpop.f32.mrb[0].mxu0
        %v1716 = vadd.f32 %v1555, %v1715
        %1717 = vmatprep.mubr.f32.mxu0 %v954
        %1718 = vmatmul.mubr.f32.gmra.mrb[0].mxu0 %v953
        %v1719 = vpop.f32.mrb[0].mxu0
        %v1720 = vadd.f32 %v1559, %v1719
        %v1721 = vpop.f32.mrb[0].mxu0
        %v1722 = vadd.f32 %v1561, %v1721
        %1723 = vmatprep.mubr.f32.mxu0 %v962
        %1724 = vmatmul.mubr.f32.gmra.mrb[0].mxu0 %v961
        %v1725 = vpop.f32.mrb[0].mxu0
        %v1726 = vadd.f32 %v1565, %v1725
        %v1727 = vpop.f32.mrb[0].mxu0
        %v1728 = vadd.f32 %v1567, %v1727
        %1729 = vmatprep.mubr.f32.mxu0 %v970
        %1730 = vmatmul.mubr.f32.gmra.mrb[0].mxu0 %v969
        %v1731 = vpop.f32.mrb[0].mxu0
        %v1732 = vadd.f32 %v1571, %v1731
        %v1733 = vpop.f32.mrb[0].mxu0
        %v1734 = vadd.f32 %v1573, %v1733
        %1735 = vmatprep.mubr.f32.mxu0 %v978
        %1736 = vmatmul.mubr.f32.gmra.mrb[0].mxu0 %v977
        %v1737 = vpop.f32.mrb[0].mxu0
        %v1738 = vadd.f32 %v1577, %v1737
        %v1739 = vpop.f32.mrb[0].mxu0
        %v1740 = vadd.f32 %v1579, %v1739
        %1741 = vmatprep.mubr.f32.mxu0 %v986
        %1742 = vmatmul.mubr.f32.gmra.mrb[0].mxu0 %v985
        %v1743 = vpop.f32.mrb[0].mxu0
        %v1744 = vadd.f32 %v1583, %v1743
        %v1745 = vpop.f32.mrb[0].mxu0
        %v1746 = vadd.f32 %v1585, %v1745
        %1747 = vmatprep.mubr.f32.mxu0 %v994
        %1748 = vmatmul.mubr.f32.gmra.mrb[0].mxu0 %v993
        %v1749 = vpop.f32.mrb[0].mxu0
        %v1750 = vadd.f32 %v1589, %v1749
        %v1751 = vpop.f32.mrb[0].mxu0
        %v1752 = vadd.f32 %v1591, %v1751
        %1753 = vmatprep.mubr.f32.mxu0 %v1002
        %1754 = vmatmul.mubr.f32.gmra.mrb[0].mxu0 %v1001
        %v1755 = vpop.f32.mrb[0].mxu0
        %v1756 = vadd.f32 %v1595, %v1755
        %v1757 = vpop.f32.mrb[0].mxu0
        %v1758 = vadd.f32 %v1597, %v1757
        %1759 = vmatprep.mubr.f32.mxu0 %v1010
        %1760 = vmatmul.mubr.f32.gmra.mrb[0].mxu0 %v1009
        %v1761 = vpop.f32.mrb[0].mxu0
        %v1762 = vadd.f32 %v1601, %v1761
        %v1763 = vpop.f32.mrb[0].mxu0
        %v1764 = vadd.f32 %v1603, %v1763
        %1765 = vmatprep.mubr.f32.mxu0 %v1018
        %1766 = vmatmul.mubr.f32.gmra.mrb[0].mxu0 %v1017
        %v1767 = vpop.f32.mrb[0].mxu0
        %v1768 = vadd.f32 %v1607, %v1767
        %v1769 = vpop.f32.mrb[0].mxu0
        %v1770 = vadd.f32 %v1609, %v1769
        %1771 = vdwg.mxu0
        %1772 = vmatprep.subr.mxu0 %v1028
        %1773 = vmatpush1.xpose.msra.mxu0 %v1027
        %1774 = vmatprep.subr.mxu0 %v1036
        %1775 = vmatpush1.xpose.msra.mxu0 %v1035
        %1776 = vmatprep.subr.mxu0 %v1044
        %1777 = vmatpush1.xpose.msra.mxu0 %v1043
        %1778 = vmatprep.subr.mxu0 %v1052
        %1779 = vmatpush1.xpose.msra.mxu0 %v1051
        %1780 = vmatprep.subr.mxu0 %v1060
        %1781 = vmatpush1.xpose.msra.mxu0 %v1059
        %1782 = vmatprep.subr.mxu0 %v1068
        %1783 = vmatpush1.xpose.msra.mxu0 %v1067
        %1784 = vmatprep.subr.mxu0 %v1076
        %1785 = vmatpush1.xpose.msra.mxu0 %v1075
        %1786 = vmatprep.subr.mxu0 %v1084
        %1787 = vmatpush1.xpose.msra.mxu0 %v1083
        %1788 = vmatprep.subr.mxu0 %v1092
        %1789 = vmatpush1.xpose.msra.mxu0 %v1091
        %1790 = vmatprep.subr.mxu0 %v1100
        %1791 = vmatpush1.xpose.msra.mxu0 %v1099
        %1792 = vmatprep.subr.mxu0 %v1108
        %1793 = vmatpush1.xpose.msra.mxu0 %v1107
        %1794 = vmatprep.subr.mxu0 %v1116
        %1795 = vmatpush1.xpose.msra.mxu0 %v1115
        %1796 = vmatprep.subr.mxu0 %v1124
        %1797 = vmatpush1.xpose.msra.mxu0 %v1123
        %1798 = vmatprep.subr.mxu0 %v1132
        %1799 = vmatpush1.xpose.msra.mxu0 %v1131
        %1800 = vmatprep.subr.mxu0 %v1140
        %1801 = vmatpush1.xpose.msra.mxu0 %v1139
        %1802 = vmatprep.subr.mxu0 %v1148
        %1803 = vmatpush1.xpose.msra.mxu0 %v1147
        %1804 = vmatprep.subr.mxu0 %v1156
        %1805 = vmatpush1.xpose.msra.mxu0 %v1155
        %1806 = vmatprep.subr.mxu0 %v1164
        %1807 = vmatpush1.xpose.msra.mxu0 %v1163
        %1808 = vmatprep.subr.mxu0 %v1172
        %1809 = vmatpush1.xpose.msra.mxu0 %v1171
        %1810 = vmatprep.subr.mxu0 %v1180
        %1811 = vmatpush1.xpose.msra.mxu0 %v1179
        %1812 = vmatprep.subr.mxu0 %v1188
        %1813 = vmatpush1.xpose.msra.mxu0 %v1187
        %1814 = vmatprep.subr.mxu0 %v1196
        %1815 = vmatpush1.xpose.msra.mxu0 %v1195
        %1816 = vmatprep.subr.mxu0 %v1204
        %1817 = vmatpush1.xpose.msra.mxu0 %v1203
        %1818 = vmatprep.subr.mxu0 %v1212
        %1819 = vmatpush1.xpose.msra.mxu0 %v1211
        %1820 = vmatprep.subr.mxu0 %v1220
        %1821 = vmatpush1.xpose.msra.mxu0 %v1219
        %1822 = vmatprep.subr.mxu0 %v1228
        %1823 = vmatpush1.xpose.msra.mxu0 %v1227
        %1824 = vmatprep.subr.mxu0 %v1236
        %1825 = vmatpush1.xpose.msra.mxu0 %v1235
        %1826 = vmatprep.subr.mxu0 %v1244
        %1827 = vmatpush1.xpose.msra.mxu0 %v1243
        %1828 = vmatprep.subr.mxu0 %v1252
        %1829 = vmatpush1.xpose.msra.mxu0 %v1251
        %1830 = vmatprep.subr.mxu0 %v1260
        %1831 = vmatpush1.xpose.msra.mxu0 %v1259
        %1832 = vmatprep.subr.mxu0 %v1268
        %1833 = vmatpush1.xpose.msra.mxu0 %v1267
        %1834 = vmatprep.subr.mxu0 %v1276
        %1835 = vmatpush1.xpose.msra.mxu0 %v1275
        %1836 = vmatprep.mubr.f32.mxu0 %v900
        %1837 = vmatmul.mubr.f32.gmra.mrb[0].mxu0 %v899
        %v1838 = vpop.f32.mrb[0].mxu0
        %v1839 = vadd.f32 %v1678, %v1838
        %v1840 = vpop.f32.mrb[0].mxu0
        %v1841 = vadd.f32 %v1680, %v1840
        %1842 = vmatprep.mubr.f32.mxu0 %v908
        %1843 = vmatmul.mubr.f32.gmra.mrb[0].mxu0 %v907
        %v1844 = vpop.f32.mrb[0].mxu0
        %v1845 = vadd.f32 %v1684, %v1844
        %v1846 = vpop.f32.mrb[0].mxu0
        %v1847 = vadd.f32 %v1686, %v1846
        %1848 = vmatprep.mubr.f32.mxu0 %v916
        %1849 = vmatmul.mubr.f32.gmra.mrb[0].mxu0 %v915
        %v1850 = vpop.f32.mrb[0].mxu0
        %v1851 = vadd.f32 %v1690, %v1850
        %v1852 = vpop.f32.mrb[0].mxu0
        %v1853 = vadd.f32 %v1692, %v1852
        %1854 = vmatprep.mubr.f32.mxu0 %v924
        %1855 = vmatmul.mubr.f32.gmra.mrb[0].mxu0 %v923
        %v1856 = vpop.f32.mrb[0].mxu0
        %v1857 = vadd.f32 %v1696, %v1856
        %v1858 = vpop.f32.mrb[0].mxu0
        %v1859 = vadd.f32 %v1698, %v1858
        %1860 = vmatprep.mubr.f32.mxu0 %v932
        %1861 = vmatmul.mubr.f32.gmra.mrb[0].mxu0 %v931
        %v1862 = vpop.f32.mrb[0].mxu0
        %v1863 = vadd.f32 %v1702, %v1862
        %v1864 = vpop.f32.mrb[0].mxu0
        %v1865 = vadd.f32 %v1704, %v1864
        %1866 = vmatprep.mubr.f32.mxu0 %v940
        %1867 = vmatmul.mubr.f32.gmra.mrb[0].mxu0 %v939
        %v1868 = vpop.f32.mrb[0].mxu0
        %v1869 = vadd.f32 %v1708, %v1868
        %v1870 = vpop.f32.mrb[0].mxu0
        %v1871 = vadd.f32 %v1710, %v1870
        %1872 = vmatprep.mubr.f32.mxu0 %v948
        %1873 = vmatmul.mubr.f32.gmra.mrb[0].mxu0 %v947
        %v1874 = vpop.f32.mrb[0].mxu0
        %v1875 = vadd.f32 %v1714, %v1874
        %v1876 = vpop.f32.mrb[0].mxu0
        %v1877 = vadd.f32 %v1716, %v1876
        %1878 = vmatprep.mubr.f32.mxu0 %v956
        %1879 = vmatmul.mubr.f32.gmra.mrb[0].mxu0 %v955
        %v1880 = vpop.f32.mrb[0].mxu0
        %v1881 = vadd.f32 %v1720, %v1880
        %v1882 = vpop.f32.mrb[0].mxu0
        %v1883 = vadd.f32 %v1722, %v1882
        %1884 = vmatprep.mubr.f32.mxu0 %v964
        %1885 = vmatmul.mubr.f32.gmra.mrb[0].mxu0 %v963
        %v1886 = vpop.f32.mrb[0].mxu0
        %v1887 = vadd.f32 %v1726, %v1886
        %v1888 = vpop.f32.mrb[0].mxu0
        %v1889 = vadd.f32 %v1728, %v1888
        %1890 = vmatprep.mubr.f32.mxu0 %v972
        %1891 = vmatmul.mubr.f32.gmra.mrb[0].mxu0 %v971
        %v1892 = vpop.f32.mrb[0].mxu0
        %v1893 = vadd.f32 %v1732, %v1892
        %v1894 = vpop.f32.mrb[0].mxu0
        %v1895 = vadd.f32 %v1734, %v1894
        %1896 = vmatprep.mubr.f32.mxu0 %v980
        %1897 = vmatmul.mubr.f32.gmra.mrb[0].mxu0 %v979
        %v1898 = vpop.f32.mrb[0].mxu0
        %v1899 = vadd.f32 %v1738, %v1898
        %v1900 = vpop.f32.mrb[0].mxu0
        %v1901 = vadd.f32 %v1740, %v1900
        %1902 = vmatprep.mubr.f32.mxu0 %v988
        %1903 = vmatmul.mubr.f32.gmra.mrb[0].mxu0 %v987
        %v1904 = vpop.f32.mrb[0].mxu0
        %v1905 = vadd.f32 %v1744, %v1904
        %v1906 = vpop.f32.mrb[0].mxu0
        %v1907 = vadd.f32 %v1746, %v1906
        %1908 = vmatprep.mubr.f32.mxu0 %v996
        %1909 = vmatmul.mubr.f32.gmra.mrb[0].mxu0 %v995
        %v1910 = vpop.f32.mrb[0].mxu0
        %v1911 = vadd.f32 %v1750, %v1910
        %v1912 = vpop.f32.mrb[0].mxu0
        %v1913 = vadd.f32 %v1752, %v1912
        %1914 = vmatprep.mubr.f32.mxu0 %v1004
        %1915 = vmatmul.mubr.f32.gmra.mrb[0].mxu0 %v1003
        %v1916 = vpop.f32.mrb[0].mxu0
        %v1917 = vadd.f32 %v1756, %v1916
        %v1918 = vpop.f32.mrb[0].mxu0
        %v1919 = vadd.f32 %v1758, %v1918
        %1920 = vmatprep.mubr.f32.mxu0 %v1012
        %1921 = vmatmul.mubr.f32.gmra.mrb[0].mxu0 %v1011
        %v1922 = vpop.f32.mrb[0].mxu0
        %v1923 = vadd.f32 %v1762, %v1922
        %v1924 = vpop.f32.mrb[0].mxu0
        %v1925 = vadd.f32 %v1764, %v1924
        %1926 = vmatprep.mubr.f32.mxu0 %v1020
        %1927 = vmatmul.mubr.f32.gmra.mrb[0].mxu0 %v1019
        %v1928 = vpop.f32.mrb[0].mxu0
        %v1929 = vadd.f32 %v1768, %v1928
        %v1930 = vpop.f32.mrb[0].mxu0
        %v1931 = vadd.f32 %v1770, %v1930
        %1932 = vdwg.mxu0
        %1933 = vst [vmem:[%s247] sm:$0xff] %v1839
        %1934 = vst [vmem:[%s247 + $0x8] sm:$0xff] %v1841
        %1935 = vst [vmem:[%s247 + $0x10] sm:$0xff] %v1845
        %1936 = vst [vmem:[%s247 + $0x18] sm:$0xff] %v1847
        %1937 = vst [vmem:[%s247 + $0x20] sm:$0xff] %v1851
        %1938 = vst [vmem:[%s247 + $0x28] sm:$0xff] %v1853
        %1939 = vst [vmem:[%s247 + $0x30] sm:$0xff] %v1857
        %1940 = vst [vmem:[%s247 + $0x38] sm:$0xff] %v1859
        %1941 = vst [vmem:[%s247 + $0x40] sm:$0xff] %v1863
        %1942 = vst [vmem:[%s247 + $0x48] sm:$0xff] %v1865
        %1943 = vst [vmem:[%s247 + $0x50] sm:$0xff] %v1869
        %1944 = vst [vmem:[%s247 + $0x58] sm:$0xff] %v1871
        %1945 = vst [vmem:[%s247 + $0x60] sm:$0xff] %v1875
        %1946 = vst [vmem:[%s247 + $0x68] sm:$0xff] %v1877
        %1947 = vst [vmem:[%s247 + $0x70] sm:$0xff] %v1881
        %1948 = vst [vmem:[%s247 + $0x78] sm:$0xff] %v1883
        %1949 = vst [vmem:[%s247 + $0x80] sm:$0xff] %v1887
        %1950 = vst [vmem:[%s247 + $0x88] sm:$0xff] %v1889
        %1951 = vst [vmem:[%s247 + $0x90] sm:$0xff] %v1893
        %1952 = vst [vmem:[%s247 + $0x98] sm:$0xff] %v1895
        %1953 = vst [vmem:[%s247 + $0xa0] sm:$0xff] %v1899
        %1954 = vst [vmem:[%s247 + $0xa8] sm:$0xff] %v1901
        %1955 = vst [vmem:[%s247 + $0xb0] sm:$0xff] %v1905
        %1956 = vst [vmem:[%s247 + $0xb8] sm:$0xff] %v1907
        %1957 = vst [vmem:[%s247 + $0xc0] sm:$0xff] %v1911
        %1958 = vst [vmem:[%s247 + $0xc8] sm:$0xff] %v1913
        %1959 = vst [vmem:[%s247 + $0xd0] sm:$0xff] %v1917
        %1960 = vst [vmem:[%s247 + $0xd8] sm:$0xff] %v1919
        %1961 = vst [vmem:[%s247 + $0xe0] sm:$0xff] %v1923
        %1962 = vst [vmem:[%s247 + $0xe8] sm:$0xff] %v1925
        %1963 = vst [vmem:[%s247 + $0xf0] sm:$0xff] %v1929
        %1964 = vst [vmem:[%s247 + $0xf8] sm:$0xff] %v1931
        %s1965 = sand.u32 %s121, 1
        %s1966 = scalar_lea.sflag [#allocation4], %s1965
        %s1967 = sand.u32 %s121, 1
        %s1968 = smul.addr %s1967, 256
        %s1969 = scalar_lea.vmem [#allocation8], %s1968
        // Predicated region
        $region45: #{tpu_custom_call.1} parent=31 // pred_check
          %p1970 = pneg %p131
        $region46: #{tpu_custom_call.1} parent=31 // pred_check_branch
          %1972 = sbr.rel (%p1970) target = $region48
        $region47: #{tpu_custom_call.1} parent=31 // pred_region
          %s1973 = smul.u32 16, %s25
          %s1974 = smul.u32 2, %s26
          %s1976 = ssub.s32 4096, 4096
          %1977 = vsyncadd %s1966, %s1976
          %s1978 = smul.addr %s1973, 2
          %s1979 = sadd.s32 %s1974, %s1978
          %s1980 = smul.addr %s1979, 128
          %s1981 = scalar_lea.hbm %s3, %s1980
          %s1982 = sshll.u32 %s1969, 4
          %s1983 = int_to_ptr.vmem [resolvable:$true] %s1982
          %1988 = dma.vmem_to_hbm [thread:$0]  %s1983, 4096, %s1981, %s1966, 256, 256, 16
        $region48: #{tpu_custom_call.1} parent=31 // pred_fallthru
          _
      $region32: #{tpu_custom_call.1} parent=5 // pred_fallthru
        _
      %p1989 = scmp.le.s32.totalorder 2, %s16
      // Predicated region
      $region49: #{tpu_custom_call.1} parent=5 // pred_check
        %p1990 = pneg %p1989
      $region50: #{tpu_custom_call.1} parent=5 // pred_check_branch
        %1992 = sbr.rel (%p1990) target = $region52
      $region51: #{tpu_custom_call.1} parent=5 // pred_region
        %s1993 = ssub.s32 %s16, 2
        // Predicated region
        $region53: #{tpu_custom_call.1} parent=51 // pred_check
          %p1994 = pneg %p137
        $region54: #{tpu_custom_call.1} parent=51 // pred_check_branch
          %1996 = sbr.rel (%p1994) target = $region56
        $region55: #{tpu_custom_call.1} parent=51 // pred_region
          %s1997 = sand.u32 %s122, 1
          %s1998 = scalar_lea.sflag [#allocation4], %s1997
          %s1999 = sand.u32 %s122, 1
          %s2000 = smul.addr %s1999, 256
          %s2001 = scalar_lea.vmem [#allocation8], %s2000
          %2002 = dma.done %s1998, 4096
        $region56: #{tpu_custom_call.1} parent=51 // pred_fallthru
          _
      $region52: #{tpu_custom_call.1} parent=5 // pred_fallthru
        _
    $region6: #{tpu_custom_call.1} parent=1 // loop_footer
      %s20 = sadd.s32 1, %s16
    $region7: #{tpu_custom_call.1} parent=1 // loop_footer_branch
      %15 = sbr.rel target = $region3
    $region8: #{tpu_custom_call.1} parent=1 // loop_exit
      _
    %2003 = vsyncpa [#allocation3], 1
    %s2004 = scalar_lea.sflag [#allocation3], 1
    %2005 = vsyncpa %s2004, 1
    %2006 = vsyncpa [#allocation6], 1
    %2007 = vsyncpa [#allocation4], 1
    %s2008 = scalar_lea.sflag [#allocation4], 1
    %2009 = vsyncpa %s2008, 1

</llo_original>
